<compile_context>
chip_gen: v7x
topology: tpu7x:2x2x1
jax: 0.10.0
libtpu: 0.0.40
codegen_flags: <defaults>
</compile_context>

<pallas_src>
import numpy as np
import jax
import jax.numpy as jnp
from jax.experimental import pallas as pl
from jax.experimental.pallas import tpu as pltpu


# --------------------------------------------------------------------------
# Pallas kernel: conv1 -> relu -> conv2 -> relu -> maxpool -> LSTM -> fc
# --------------------------------------------------------------------------
def hybrid_kernel(x_ref, mfirst_ref, mlast_ref,
                  w1_ref, b1_ref, w2_ref, b2_ref,
                  wih_ref, whh_ref, blstm_ref, wfc_ref, bfc_ref,
                  o_ref, h2_scr, gates_scr):
    f32 = jnp.float32
    cdt = w1_ref.dtype                     # compute dtype for MXU operands (f32 or bf16)
    N = x_ref.shape[0]                     # batch_block * T
    Bblk = o_ref.shape[0]                  # batch rows handled by this grid step
    N2 = gates_scr.shape[0]                # batch_block * T2
    T2 = N2 // Bblk
    H = whh_ref.shape[0]

    m_first = mfirst_ref[...]              # (N,1): 0. on rows with t == 0, else 1.
    m_last = mlast_ref[...]                # (N,1): 0. on rows with t == T-1, else 1.

    def conv3_relu(a, w_ref, b_ref):
        # Conv1d(k=3, padding=1) along time: taps t-1 / t / t+1 via XLU roll + VPU
        # mask (zero padding at batch/sequence boundaries), one MXU matmul per tap.
        a_m = pltpu.roll(a, 1, 0) * m_first       # a_m[r] = a[r-1], zero at t == 0
        a_p = pltpu.roll(a, N - 1, 0) * m_last    # a_p[r] = a[r+1], zero at t == T-1
        y = (jnp.dot(a_m.astype(cdt), w_ref[0], preferred_element_type=f32)
             + jnp.dot(a.astype(cdt),   w_ref[1], preferred_element_type=f32)
             + jnp.dot(a_p.astype(cdt), w_ref[2], preferred_element_type=f32)
             + b_ref[...])
        return jnp.maximum(y, 0.0)

    x = x_ref[...].astype(f32)                       # (N, Cin)
    h1 = conv3_relu(x, w1_ref, b1_ref)               # (N, 16)
    h2_scr[...] = conv3_relu(h1, w2_ref, b2_ref)     # (N, 32)

    # MaxPool1d(kernel=2, stride=2) along time: pure VPU max of even/odd rows.
    pooled = jnp.maximum(h2_scr[pl.ds(0, N2, stride=2), :],
                         h2_scr[pl.ds(1, N2, stride=2), :])          # (N2, 32)

    # Hoisted LSTM input projection: one well-filled matmul outside the recurrence.
    gates_scr[...] = (jnp.dot(pooled.astype(cdt), wih_ref[...],
                              preferred_element_type=f32) + blstm_ref[...])

    whh = whh_ref[...]                               # (H, 4H)
    h = jnp.zeros((Bblk, H), f32)
    c = jnp.zeros((Bblk, H), f32)
    # T2 is small here; static unroll keeps it simple.
    # TODO(synk): switch to lax.fori_loop(..., unroll=True) if T2 grows beyond ~8.
    for t in range(T2):
        gates = (gates_scr[pl.ds(t, Bblk, stride=T2), :]             # (Bblk, 4H)
                 + jnp.dot(h.astype(cdt), whh, preferred_element_type=f32))
        i_g = jax.nn.sigmoid(gates[:, 0:H])
        f_g = jax.nn.sigmoid(gates[:, H:2 * H])
        g_g = jnp.tanh(gates[:, 2 * H:3 * H])
        o_g = jax.nn.sigmoid(gates[:, 3 * H:4 * H])
        c = f_g * c + i_g * g_g
        h = o_g * jnp.tanh(c)

    # fc on the last hidden state
    o_ref[...] = (jnp.dot(h.astype(cdt), wfc_ref[...], preferred_element_type=f32)
                  + bfc_ref[...])


# --------------------------------------------------------------------------
# Wrapper: rearranges PyTorch-layout params, builds tiny boundary masks, and
# calls the Pallas kernel with a (parallel) batch grid.
# --------------------------------------------------------------------------
def hybrid_cnn_lstm_forward(x, params, *, compute_dtype=jnp.float32, batch_block=None):
    """x: (B, T, input_size) float32 -- same as the torch module's input."""
    W1, b1, W2, b2, Wih, Whh, bih, bhh, Wfc, bfc = params
    B, T, Cin = x.shape
    assert T % 2 == 0, "MaxPool1d(2,2): this kernel assumes an even sequence length"
    T2 = T // 2
    H = Whh.shape[1]
    F = Wfc.shape[0]              # = 2 * prediction_horizon
    C1 = W1.shape[0]              # 16
    C2 = W2.shape[0]              # 32

    if batch_block is None:
        # Split large batches into 8-row parallel grid steps (2 TCs on v7x, smaller
        # 64 MiB VMEM); tiny batches stay as a single block so the (8,128) BlockSpec
        # constraints are trivially satisfied.
        batch_block = 8 if (B > 8 and B % 8 == 0) else B
    assert B % batch_block == 0
    n_blocks = B // batch_block
    Nb = batch_block * T
    N2b = batch_block * T2

    f32 = jnp.float32
    cdt = compute_dtype

    # Per-block boundary masks (same pattern for every batch block): they zero the
    # circular wrap of pltpu.roll at t==0 / t==T-1, i.e. Conv1d's zero padding.
    t_idx = np.arange(Nb) % T
    m_first = (t_idx != 0).astype(np.float32).reshape(Nb, 1)
    m_last = (t_idx != T - 1).astype(np.float32).reshape(Nb, 1)

    # Rearrange PyTorch-layout params (all right-multiplied). Weights optionally bf16;
    # biases and accumulation stay f32.
    w1k = jnp.transpose(W1, (2, 1, 0)).astype(cdt)        # (3, Cin, 16), taps t-1,t,t+1
    w2k = jnp.transpose(W2, (2, 1, 0)).astype(cdt)        # (3, 16, 32)
    b1r = b1.reshape(1, -1).astype(f32)
    b2r = b2.reshape(1, -1).astype(f32)
    wihT = Wih.T.astype(cdt)                              # (32, 4H)
    whhT = Whh.T.astype(cdt)                              # (H, 4H)
    blstm = (bih + bhh).reshape(1, -1).astype(f32)        # (1, 4H)
    wfcT = Wfc.T.astype(cdt)                              # (H, F)
    bfcr = bfc.reshape(1, -1).astype(f32)

    x2 = x.reshape(B * T, Cin).astype(f32)

    def full(shape):
        return pl.BlockSpec(shape, lambda i, _s=shape: (0,) * len(_s))

    grid_spec = pltpu.PrefetchScalarGridSpec(
        num_scalar_prefetch=0,
        grid=(n_blocks,),
        in_specs=[
            pl.BlockSpec((Nb, Cin), lambda i: (i, 0)),    # x (batch block)
            full((Nb, 1)), full((Nb, 1)),                 # boundary masks
            full((3, Cin, C1)), full((1, C1)),            # conv1
            full((3, C1, C2)), full((1, C2)),             # conv2
            full((C2, 4 * H)), full((H, 4 * H)), full((1, 4 * H)),   # lstm
            full((H, F)), full((1, F)),                   # fc
        ],
        out_specs=pl.BlockSpec((batch_block, F), lambda i: (i, 0)),
        scratch_shapes=[
            pltpu.VMEM((Nb, C2), f32),          # conv2 output (for strided pooling reads)
            pltpu.VMEM((N2b, 4 * H), f32),      # hoisted LSTM input gates
        ],
    )

    out = pl.pallas_call(
        hybrid_kernel,
        out_shape=jax.ShapeDtypeStruct((B, F), f32),
        grid_spec=grid_spec,
        compiler_params=pltpu.CompilerParams(dimension_semantics=("parallel",)),
    )(x2, jnp.asarray(m_first), jnp.asarray(m_last),
      w1k, b1r, w2k, b2r, wihT, whhT, blstm, wfcT, bfcr)

    return out.reshape(B, F // 2, 2)


# --------------------------------------------------------------------------
# Pure-JAX reference (independent formulation) for correctness checking.
# --------------------------------------------------------------------------
def reference_forward(x, params):
    W1, b1, W2, b2, Wih, Whh, bih, bhh, Wfc, bfc = params
    a = jnp.transpose(x, (0, 2, 1))                  # (B, Cin, T)

    def conv1d(a, W, b):
        B_, Ci, T_ = a.shape
        apad = jnp.pad(a, ((0, 0), (0, 0), (1, 1)))
        out = jnp.zeros((B_, W.shape[0], T_), jnp.float32) + b[None, :, None]
        for k in range(3):
            out = out + jnp.einsum('oi,bit->bot', W[:, :, k], apad[:, :, k:k + T_])
        return out

    a = jax.nn.relu(conv1d(a, W1, b1))
    a = jax.nn.relu(conv1d(a, W2, b2))
    B_, C_, T_ = a.shape
    a = a[:, :, :(T_ // 2) * 2].reshape(B_, C_, T_ // 2, 2).max(axis=-1)
    a = jnp.transpose(a, (0, 2, 1))                  # (B, T2, C)
    H = Whh.shape[1]
    h = jnp.zeros((B_, H), jnp.float32)
    c = jnp.zeros((B_, H), jnp.float32)
    for t in range(a.shape[1]):
        gates = a[:, t, :] @ Wih.T + bih + h @ Whh.T + bhh
        i = jax.nn.sigmoid(gates[:, :H])
        f = jax.nn.sigmoid(gates[:, H:2 * H])
        g = jnp.tanh(gates[:, 2 * H:3 * H])
        o = jax.nn.sigmoid(gates[:, 3 * H:4 * H])
        c = f * c + i * g
        h = o * jnp.tanh(c)
    out = h @ Wfc.T + bfc
    return out.reshape(B_, -1, 2)


if __name__ == "__main__":
    # Module hyperparameters (defaults of HybridCNNLSTM)
    input_size, hidden_size, prediction_horizon = 6, 32, 6
    B, T = 2, 8                                        # small batch / sequence

    key = jax.random.PRNGKey(0)
    ks = jax.random.split(key, 11)
    rnd = lambda k, s: (jax.random.normal(k, s, jnp.float32) * 0.1)

    W1 = rnd(ks[0], (16, input_size, 3)); b1 = rnd(ks[1], (16,))
    W2 = rnd(ks[2], (32, 16, 3));         b2 = rnd(ks[3], (32,))
    Wih = rnd(ks[4], (4 * hidden_size, 32))
    Whh = rnd(ks[5], (4 * hidden_size, hidden_size))
    bih = rnd(ks[6], (4 * hidden_size,))
    bhh = rnd(ks[7], (4 * hidden_size,))
    Wfc = rnd(ks[8], (2 * prediction_horizon, hidden_size))
    bfc = rnd(ks[9], (2 * prediction_horizon,))
    params = (W1, b1, W2, b2, Wih, Whh, bih, bhh, Wfc, bfc)

    x = jax.random.normal(ks[10], (B, T, input_size), jnp.float32)

    ref = jax.block_until_ready(reference_forward(x, params))

    # f32 path: tight correctness check.
    out = jax.block_until_ready(hybrid_cnn_lstm_forward(x, params))
    assert out.shape == (B, prediction_horizon, 2), out.shape
    np.testing.assert_allclose(np.asarray(out), np.asarray(ref), rtol=1e-4, atol=1e-4)

    # bf16-weight path (halves weight VMEM/DMA, 2x MXU rate); accumulation stays f32,
    # so only a loose tolerance is needed.
    out_bf16 = jax.block_until_ready(
        hybrid_cnn_lstm_forward(x, params, compute_dtype=jnp.bfloat16))
    np.testing.assert_allclose(np.asarray(out_bf16), np.asarray(ref), rtol=2e-2, atol=2e-2)

    print("KERNEL_OK")
</pallas_src>

<mosaic_0001>
module attributes {stable_mosaic.version = 11 : i64} {
  func.func @hybrid_kernel(%arg0: i32, %arg1: memref<16x6xf32, #tpu.memory_space<vmem>>, %arg2: memref<16x1xf32, #tpu.memory_space<vmem>>, %arg3: memref<16x1xf32, #tpu.memory_space<vmem>>, %arg4: memref<3x6x16xf32, #tpu.memory_space<vmem>>, %arg5: memref<1x16xf32, #tpu.memory_space<vmem>>, %arg6: memref<3x16x32xf32, #tpu.memory_space<vmem>>, %arg7: memref<1x32xf32, #tpu.memory_space<vmem>>, %arg8: memref<32x128xf32, #tpu.memory_space<vmem>>, %arg9: memref<32x128xf32, #tpu.memory_space<vmem>>, %arg10: memref<1x128xf32, #tpu.memory_space<vmem>>, %arg11: memref<32x12xf32, #tpu.memory_space<vmem>>, %arg12: memref<1x12xf32, #tpu.memory_space<vmem>>, %arg13: memref<2x12xf32, #tpu.memory_space<vmem>>, %arg14: memref<16x32xf32, #tpu.memory_space<vmem>>, %arg15: memref<8x128xf32, #tpu.memory_space<vmem>>) attributes {dimension_semantics = [#tpu.dimension_semantics<parallel>], iteration_bounds = array<i64: 1>, scalar_prefetch = 0 : i64, scratch_operands = 2 : i64, tpu.core_type = #tpu.core_type<tc>, window_params = [{transform_indices = @transform_0, window_bounds = array<i64: 16, 6>}, {pipeline_mode = #tpu.pipeline_mode<synchronous>, transform_indices = @transform_1, window_bounds = array<i64: 16, 1>}, {pipeline_mode = #tpu.pipeline_mode<synchronous>, transform_indices = @transform_2, window_bounds = array<i64: 16, 1>}, {pipeline_mode = #tpu.pipeline_mode<synchronous>, transform_indices = @transform_3, window_bounds = array<i64: 3, 6, 16>}, {pipeline_mode = #tpu.pipeline_mode<synchronous>, transform_indices = @transform_4, window_bounds = array<i64: 1, 16>}, {pipeline_mode = #tpu.pipeline_mode<synchronous>, transform_indices = @transform_5, window_bounds = array<i64: 3, 16, 32>}, {pipeline_mode = #tpu.pipeline_mode<synchronous>, transform_indices = @transform_6, window_bounds = array<i64: 1, 32>}, {pipeline_mode = #tpu.pipeline_mode<synchronous>, transform_indices = @transform_7, window_bounds = array<i64: 32, 128>}, {pipeline_mode = #tpu.pipeline_mode<synchronous>, transform_indices = @transform_8, window_bounds = array<i64: 32, 128>}, {pipeline_mode = #tpu.pipeline_mode<synchronous>, transform_indices = @transform_9, window_bounds = array<i64: 1, 128>}, {pipeline_mode = #tpu.pipeline_mode<synchronous>, transform_indices = @transform_10, window_bounds = array<i64: 32, 12>}, {pipeline_mode = #tpu.pipeline_mode<synchronous>, transform_indices = @transform_11, window_bounds = array<i64: 1, 12>}, {transform_indices = @transform_12, window_bounds = array<i64: 2, 12>}]} {
    %c0 = arith.constant 0 : index
    %c0_0 = arith.constant 0 : index
    %0 = vector.load %arg2[%c0, %c0_0] : memref<16x1xf32, #tpu.memory_space<vmem>>, vector<16x1xf32>
    %c0_1 = arith.constant 0 : index
    %c0_2 = arith.constant 0 : index
    %1 = vector.load %arg3[%c0_1, %c0_2] : memref<16x1xf32, #tpu.memory_space<vmem>>, vector<16x1xf32>
    %c0_3 = arith.constant 0 : index
    %c0_4 = arith.constant 0 : index
    %2 = vector.load %arg1[%c0_3, %c0_4] : memref<16x6xf32, #tpu.memory_space<vmem>>, vector<16x6xf32>
    %c1_i32 = arith.constant 1 : i32
    %3 = tpu.dynamic_rotate %2 by %c1_i32 dim 0 : vector<16x6xf32>, i32 -> vector<16x6xf32>
    %4 = vector.broadcast %0 : vector<16x1xf32> to vector<16x6xf32>
    %5 = arith.mulf %3, %4 : vector<16x6xf32>
    %c15_i32 = arith.constant 15 : i32
    %6 = tpu.dynamic_rotate %2 by %c15_i32 dim 0 : vector<16x6xf32>, i32 -> vector<16x6xf32>
    %7 = vector.broadcast %1 : vector<16x1xf32> to vector<16x6xf32>
    %8 = arith.mulf %6, %7 : vector<16x6xf32>
    %c0_5 = arith.constant 0 : index
    %c0_6 = arith.constant 0 : index
    %c0_7 = arith.constant 0 : index
    %9 = vector.load %arg4[%c0_5, %c0_6, %c0_7] : memref<3x6x16xf32, #tpu.memory_space<vmem>>, vector<1x6x16xf32>
    %10 = vector.shape_cast %9 : vector<1x6x16xf32> to vector<6x16xf32>
    %cst = arith.constant dense<0.000000e+00> : vector<16x16xf32>
    %11 = tpu.matmul %5, %10, %cst {dimension_numbers = #tpu.dot_dimension_numbers<[1], [0], [0], [1], [0, 0, 1, 1], [], []>} : vector<16x6xf32>, vector<6x16xf32>, vector<16x16xf32> -> vector<16x16xf32>
    %c1 = arith.constant 1 : index
    %c0_8 = arith.constant 0 : index
    %c0_9 = arith.constant 0 : index
    %12 = vector.load %arg4[%c1, %c0_8, %c0_9] : memref<3x6x16xf32, #tpu.memory_space<vmem>>, vector<1x6x16xf32>
    %13 = vector.shape_cast %12 : vector<1x6x16xf32> to vector<6x16xf32>
    %cst_10 = arith.constant dense<0.000000e+00> : vector<16x16xf32>
    %14 = tpu.matmul %2, %13, %cst_10 {dimension_numbers = #tpu.dot_dimension_numbers<[1], [0], [0], [1], [0, 0, 1, 1], [], []>} : vector<16x6xf32>, vector<6x16xf32>, vector<16x16xf32> -> vector<16x16xf32>
    %15 = arith.addf %11, %14 : vector<16x16xf32>
    %c2 = arith.constant 2 : index
    %c0_11 = arith.constant 0 : index
    %c0_12 = arith.constant 0 : index
    %16 = vector.load %arg4[%c2, %c0_11, %c0_12] : memref<3x6x16xf32, #tpu.memory_space<vmem>>, vector<1x6x16xf32>
    %17 = vector.shape_cast %16 : vector<1x6x16xf32> to vector<6x16xf32>
    %cst_13 = arith.constant dense<0.000000e+00> : vector<16x16xf32>
    %18 = tpu.matmul %8, %17, %cst_13 {dimension_numbers = #tpu.dot_dimension_numbers<[1], [0], [0], [1], [0, 0, 1, 1], [], []>} : vector<16x6xf32>, vector<6x16xf32>, vector<16x16xf32> -> vector<16x16xf32>
    %19 = arith.addf %15, %18 : vector<16x16xf32>
    %c0_14 = arith.constant 0 : index
    %c0_15 = arith.constant 0 : index
    %20 = vector.load %arg5[%c0_14, %c0_15] : memref<1x16xf32, #tpu.memory_space<vmem>>, vector<1x16xf32>
    %21 = vector.broadcast %20 : vector<1x16xf32> to vector<16x16xf32>
    %22 = arith.addf %19, %21 : vector<16x16xf32>
    %cst_16 = arith.constant 0.000000e+00 : f32
    %23 = vector.broadcast %cst_16 : f32 to vector<16x16xf32>
    %24 = arith.maximumf %22, %23 : vector<16x16xf32>
    %c1_i32_17 = arith.constant 1 : i32
    %25 = tpu.dynamic_rotate %24 by %c1_i32_17 dim 0 : vector<16x16xf32>, i32 -> vector<16x16xf32>
    %26 = vector.broadcast %0 : vector<16x1xf32> to vector<16x16xf32>
    %27 = arith.mulf %25, %26 : vector<16x16xf32>
    %c15_i32_18 = arith.constant 15 : i32
    %28 = tpu.dynamic_rotate %24 by %c15_i32_18 dim 0 : vector<16x16xf32>, i32 -> vector<16x16xf32>
    %29 = vector.broadcast %1 : vector<16x1xf32> to vector<16x16xf32>
    %30 = arith.mulf %28, %29 : vector<16x16xf32>
    %c0_19 = arith.constant 0 : index
    %c0_20 = arith.constant 0 : index
    %c0_21 = arith.constant 0 : index
    %31 = vector.load %arg6[%c0_19, %c0_20, %c0_21] : memref<3x16x32xf32, #tpu.memory_space<vmem>>, vector<1x16x32xf32>
    %32 = vector.shape_cast %31 : vector<1x16x32xf32> to vector<16x32xf32>
    %cst_22 = arith.constant dense<0.000000e+00> : vector<16x32xf32>
    %33 = tpu.matmul %27, %32, %cst_22 {dimension_numbers = #tpu.dot_dimension_numbers<[1], [0], [0], [1], [0, 0, 1, 1], [], []>} : vector<16x16xf32>, vector<16x32xf32>, vector<16x32xf32> -> vector<16x32xf32>
    %c1_23 = arith.constant 1 : index
    %c0_24 = arith.constant 0 : index
    %c0_25 = arith.constant 0 : index
    %34 = vector.load %arg6[%c1_23, %c0_24, %c0_25] : memref<3x16x32xf32, #tpu.memory_space<vmem>>, vector<1x16x32xf32>
    %35 = vector.shape_cast %34 : vector<1x16x32xf32> to vector<16x32xf32>
    %cst_26 = arith.constant dense<0.000000e+00> : vector<16x32xf32>
    %36 = tpu.matmul %24, %35, %cst_26 {dimension_numbers = #tpu.dot_dimension_numbers<[1], [0], [0], [1], [0, 0, 1, 1], [], []>} : vector<16x16xf32>, vector<16x32xf32>, vector<16x32xf32> -> vector<16x32xf32>
    %37 = arith.addf %33, %36 : vector<16x32xf32>
    %c2_27 = arith.constant 2 : index
    %c0_28 = arith.constant 0 : index
    %c0_29 = arith.constant 0 : index
    %38 = vector.load %arg6[%c2_27, %c0_28, %c0_29] : memref<3x16x32xf32, #tpu.memory_space<vmem>>, vector<1x16x32xf32>
    %39 = vector.shape_cast %38 : vector<1x16x32xf32> to vector<16x32xf32>
    %cst_30 = arith.constant dense<0.000000e+00> : vector<16x32xf32>
    %40 = tpu.matmul %30, %39, %cst_30 {dimension_numbers = #tpu.dot_dimension_numbers<[1], [0], [0], [1], [0, 0, 1, 1], [], []>} : vector<16x16xf32>, vector<16x32xf32>, vector<16x32xf32> -> vector<16x32xf32>
    %41 = arith.addf %37, %40 : vector<16x32xf32>
    %c0_31 = arith.constant 0 : index
    %c0_32 = arith.constant 0 : index
    %42 = vector.load %arg7[%c0_31, %c0_32] : memref<1x32xf32, #tpu.memory_space<vmem>>, vector<1x32xf32>
    %43 = vector.broadcast %42 : vector<1x32xf32> to vector<16x32xf32>
    %44 = arith.addf %41, %43 : vector<16x32xf32>
    %cst_33 = arith.constant 0.000000e+00 : f32
    %45 = vector.broadcast %cst_33 : f32 to vector<16x32xf32>
    %46 = arith.maximumf %44, %45 : vector<16x32xf32>
    %c0_34 = arith.constant 0 : index
    %c0_35 = arith.constant 0 : index
    %47 = vector.load %arg14[%c0_34, %c0_35] : memref<16x32xf32, #tpu.memory_space<vmem>>, vector<16x32xf32>
    tpu.vector_store %arg14[%c0_34, %c0_35], %46 {strides = array<i32>} : memref<16x32xf32, #tpu.memory_space<vmem>>, vector<16x32xf32>,
    %c0_36 = arith.constant 0 : index
    %c0_37 = arith.constant 0 : index
    %48 = tpu.strided_load %arg14[%c0_36, %c0_37] {strides = array<i32: 2, 1>} : memref<16x32xf32, #tpu.memory_space<vmem>>, vector<8x32xf32>
    %c1_38 = arith.constant 1 : index
    %c0_39 = arith.constant 0 : index
    %49 = tpu.strided_load %arg14[%c1_38, %c0_39] {strides = array<i32: 2, 1>} : memref<16x32xf32, #tpu.memory_space<vmem>>, vector<8x32xf32>
    %50 = arith.maximumf %48, %49 : vector<8x32xf32>
    %c0_40 = arith.constant 0 : index
    %c0_41 = arith.constant 0 : index
    %51 = vector.load %arg8[%c0_40, %c0_41] : memref<32x128xf32, #tpu.memory_space<vmem>>, vector<32x128xf32>
    %cst_42 = arith.constant dense<0.000000e+00> : vector<8x128xf32>
    %52 = tpu.matmul %50, %51, %cst_42 {dimension_numbers = #tpu.dot_dimension_numbers<[1], [0], [0], [1], [0, 0, 1, 1], [], []>} : vector<8x32xf32>, vector<32x128xf32>, vector<8x128xf32> -> vector<8x128xf32>
    %c0_43 = arith.constant 0 : index
    %c0_44 = arith.constant 0 : index
    %53 = vector.load %arg10[%c0_43, %c0_44] : memref<1x128xf32, #tpu.memory_space<vmem>>, vector<1x128xf32>
    %54 = vector.broadcast %53 : vector<1x128xf32> to vector<8x128xf32>
    %55 = arith.addf %52, %54 : vector<8x128xf32>
    %c0_45 = arith.constant 0 : index
    %c0_46 = arith.constant 0 : index
    %56 = vector.load %arg15[%c0_45, %c0_46] : memref<8x128xf32, #tpu.memory_space<vmem>>, vector<8x128xf32>
    tpu.vector_store %arg15[%c0_45, %c0_46], %55 {strides = array<i32>} : memref<8x128xf32, #tpu.memory_space<vmem>>, vector<8x128xf32>,
    %c0_47 = arith.constant 0 : index
    %c0_48 = arith.constant 0 : index
    %57 = vector.load %arg9[%c0_47, %c0_48] : memref<32x128xf32, #tpu.memory_space<vmem>>, vector<32x128xf32>
    %cst_49 = arith.constant 0.000000e+00 : f32
    %58 = vector.broadcast %cst_49 : f32 to vector<2x32xf32>
    %cst_50 = arith.constant 0.000000e+00 : f32
    %59 = vector.broadcast %cst_50 : f32 to vector<2x32xf32>
    %c0_51 = arith.constant 0 : index
    %c0_52 = arith.constant 0 : index
    %60 = tpu.strided_load %arg15[%c0_51, %c0_52] {strides = array<i32: 4, 1>} : memref<8x128xf32, #tpu.memory_space<vmem>>, vector<2x128xf32>
    %cst_53 = arith.constant dense<0.000000e+00> : vector<2x128xf32>
    %61 = tpu.matmul %58, %57, %cst_53 {dimension_numbers = #tpu.dot_dimension_numbers<[1], [0], [0], [1], [0, 0, 1, 1], [], []>} : vector<2x32xf32>, vector<32x128xf32>, vector<2x128xf32> -> vector<2x128xf32>
    %62 = arith.addf %60, %61 : vector<2x128xf32>
    %63 = vector.extract_strided_slice %62 {offsets = [0, 0], sizes = [2, 32], strides = [1, 1]} : vector<2x128xf32> to vector<2x32xf32>
    %64 = arith.negf %63 : vector<2x32xf32>
    %65 = math.exp %64 : vector<2x32xf32>
    %cst_54 = arith.constant 1.000000e+00 : f32
    %66 = vector.broadcast %cst_54 : f32 to vector<2x32xf32>
    %67 = arith.addf %66, %65 : vector<2x32xf32>
    %68 = arith.divf %66, %67 : vector<2x32xf32>
    %69 = vector.extract_strided_slice %62 {offsets = [0, 32], sizes = [2, 32], strides = [1, 1]} : vector<2x128xf32> to vector<2x32xf32>
    %70 = arith.negf %69 : vector<2x32xf32>
    %71 = math.exp %70 : vector<2x32xf32>
    %cst_55 = arith.constant 1.000000e+00 : f32
    %72 = vector.broadcast %cst_55 : f32 to vector<2x32xf32>
    %73 = arith.addf %72, %71 : vector<2x32xf32>
    %74 = arith.divf %72, %73 : vector<2x32xf32>
    %75 = vector.extract_strided_slice %62 {offsets = [0, 64], sizes = [2, 32], strides = [1, 1]} : vector<2x128xf32> to vector<2x32xf32>
    %76 = math.tanh %75 : vector<2x32xf32>
    %77 = vector.extract_strided_slice %62 {offsets = [0, 96], sizes = [2, 32], strides = [1, 1]} : vector<2x128xf32> to vector<2x32xf32>
    %78 = arith.negf %77 : vector<2x32xf32>
    %79 = math.exp %78 : vector<2x32xf32>
    %cst_56 = arith.constant 1.000000e+00 : f32
    %80 = vector.broadcast %cst_56 : f32 to vector<2x32xf32>
    %81 = arith.addf %80, %79 : vector<2x32xf32>
    %82 = arith.divf %80, %81 : vector<2x32xf32>
    %83 = arith.mulf %74, %59 : vector<2x32xf32>
    %84 = arith.mulf %68, %76 : vector<2x32xf32>
    %85 = arith.addf %83, %84 : vector<2x32xf32>
    %86 = math.tanh %85 : vector<2x32xf32>
    %87 = arith.mulf %82, %86 : vector<2x32xf32>
    %c1_57 = arith.constant 1 : index
    %c0_58 = arith.constant 0 : index
    %88 = tpu.strided_load %arg15[%c1_57, %c0_58] {strides = array<i32: 4, 1>} : memref<8x128xf32, #tpu.memory_space<vmem>>, vector<2x128xf32>
    %cst_59 = arith.constant dense<0.000000e+00> : vector<2x128xf32>
    %89 = tpu.matmul %87, %57, %cst_59 {dimension_numbers = #tpu.dot_dimension_numbers<[1], [0], [0], [1], [0, 0, 1, 1], [], []>} : vector<2x32xf32>, vector<32x128xf32>, vector<2x128xf32> -> vector<2x128xf32>
    %90 = arith.addf %88, %89 : vector<2x128xf32>
    %91 = vector.extract_strided_slice %90 {offsets = [0, 0], sizes = [2, 32], strides = [1, 1]} : vector<2x128xf32> to vector<2x32xf32>
    %92 = arith.negf %91 : vector<2x32xf32>
    %93 = math.exp %92 : vector<2x32xf32>
    %cst_60 = arith.constant 1.000000e+00 : f32
    %94 = vector.broadcast %cst_60 : f32 to vector<2x32xf32>
    %95 = arith.addf %94, %93 : vector<2x32xf32>
    %96 = arith.divf %94, %95 : vector<2x32xf32>
    %97 = vector.extract_strided_slice %90 {offsets = [0, 32], sizes = [2, 32], strides = [1, 1]} : vector<2x128xf32> to vector<2x32xf32>
    %98 = arith.negf %97 : vector<2x32xf32>
    %99 = math.exp %98 : vector<2x32xf32>
    %cst_61 = arith.constant 1.000000e+00 : f32
    %100 = vector.broadcast %cst_61 : f32 to vector<2x32xf32>
    %101 = arith.addf %100, %99 : vector<2x32xf32>
    %102 = arith.divf %100, %101 : vector<2x32xf32>
    %103 = vector.extract_strided_slice %90 {offsets = [0, 64], sizes = [2, 32], strides = [1, 1]} : vector<2x128xf32> to vector<2x32xf32>
    %104 = math.tanh %103 : vector<2x32xf32>
    %105 = vector.extract_strided_slice %90 {offsets = [0, 96], sizes = [2, 32], strides = [1, 1]} : vector<2x128xf32> to vector<2x32xf32>
    %106 = arith.negf %105 : vector<2x32xf32>
    %107 = math.exp %106 : vector<2x32xf32>
    %cst_62 = arith.constant 1.000000e+00 : f32
    %108 = vector.broadcast %cst_62 : f32 to vector<2x32xf32>
    %109 = arith.addf %108, %107 : vector<2x32xf32>
    %110 = arith.divf %108, %109 : vector<2x32xf32>
    %111 = arith.mulf %102, %85 : vector<2x32xf32>
    %112 = arith.mulf %96, %104 : vector<2x32xf32>
    %113 = arith.addf %111, %112 : vector<2x32xf32>
    %114 = math.tanh %113 : vector<2x32xf32>
    %115 = arith.mulf %110, %114 : vector<2x32xf32>
    %c2_63 = arith.constant 2 : index
    %c0_64 = arith.constant 0 : index
    %116 = tpu.strided_load %arg15[%c2_63, %c0_64] {strides = array<i32: 4, 1>} : memref<8x128xf32, #tpu.memory_space<vmem>>, vector<2x128xf32>
    %cst_65 = arith.constant dense<0.000000e+00> : vector<2x128xf32>
    %117 = tpu.matmul %115, %57, %cst_65 {dimension_numbers = #tpu.dot_dimension_numbers<[1], [0], [0], [1], [0, 0, 1, 1], [], []>} : vector<2x32xf32>, vector<32x128xf32>, vector<2x128xf32> -> vector<2x128xf32>
    %118 = arith.addf %116, %117 : vector<2x128xf32>
    %119 = vector.extract_strided_slice %118 {offsets = [0, 0], sizes = [2, 32], strides = [1, 1]} : vector<2x128xf32> to vector<2x32xf32>
    %120 = arith.negf %119 : vector<2x32xf32>
    %121 = math.exp %120 : vector<2x32xf32>
    %cst_66 = arith.constant 1.000000e+00 : f32
    %122 = vector.broadcast %cst_66 : f32 to vector<2x32xf32>
    %123 = arith.addf %122, %121 : vector<2x32xf32>
    %124 = arith.divf %122, %123 : vector<2x32xf32>
    %125 = vector.extract_strided_slice %118 {offsets = [0, 32], sizes = [2, 32], strides = [1, 1]} : vector<2x128xf32> to vector<2x32xf32>
    %126 = arith.negf %125 : vector<2x32xf32>
    %127 = math.exp %126 : vector<2x32xf32>
    %cst_67 = arith.constant 1.000000e+00 : f32
    %128 = vector.broadcast %cst_67 : f32 to vector<2x32xf32>
    %129 = arith.addf %128, %127 : vector<2x32xf32>
    %130 = arith.divf %128, %129 : vector<2x32xf32>
    %131 = vector.extract_strided_slice %118 {offsets = [0, 64], sizes = [2, 32], strides = [1, 1]} : vector<2x128xf32> to vector<2x32xf32>
    %132 = math.tanh %131 : vector<2x32xf32>
    %133 = vector.extract_strided_slice %118 {offsets = [0, 96], sizes = [2, 32], strides = [1, 1]} : vector<2x128xf32> to vector<2x32xf32>
    %134 = arith.negf %133 : vector<2x32xf32>
    %135 = math.exp %134 : vector<2x32xf32>
    %cst_68 = arith.constant 1.000000e+00 : f32
    %136 = vector.broadcast %cst_68 : f32 to vector<2x32xf32>
    %137 = arith.addf %136, %135 : vector<2x32xf32>
    %138 = arith.divf %136, %137 : vector<2x32xf32>
    %139 = arith.mulf %130, %113 : vector<2x32xf32>
    %140 = arith.mulf %124, %132 : vector<2x32xf32>
    %141 = arith.addf %139, %140 : vector<2x32xf32>
    %142 = math.tanh %141 : vector<2x32xf32>
    %143 = arith.mulf %138, %142 : vector<2x32xf32>
    %c3 = arith.constant 3 : index
    %c0_69 = arith.constant 0 : index
    %144 = tpu.strided_load %arg15[%c3, %c0_69] {strides = array<i32: 4, 1>} : memref<8x128xf32, #tpu.memory_space<vmem>>, vector<2x128xf32>
    %cst_70 = arith.constant dense<0.000000e+00> : vector<2x128xf32>
    %145 = tpu.matmul %143, %57, %cst_70 {dimension_numbers = #tpu.dot_dimension_numbers<[1], [0], [0], [1], [0, 0, 1, 1], [], []>} : vector<2x32xf32>, vector<32x128xf32>, vector<2x128xf32> -> vector<2x128xf32>
    %146 = arith.addf %144, %145 : vector<2x128xf32>
    %147 = vector.extract_strided_slice %146 {offsets = [0, 0], sizes = [2, 32], strides = [1, 1]} : vector<2x128xf32> to vector<2x32xf32>
    %148 = arith.negf %147 : vector<2x32xf32>
    %149 = math.exp %148 : vector<2x32xf32>
    %cst_71 = arith.constant 1.000000e+00 : f32
    %150 = vector.broadcast %cst_71 : f32 to vector<2x32xf32>
    %151 = arith.addf %150, %149 : vector<2x32xf32>
    %152 = arith.divf %150, %151 : vector<2x32xf32>
    %153 = vector.extract_strided_slice %146 {offsets = [0, 32], sizes = [2, 32], strides = [1, 1]} : vector<2x128xf32> to vector<2x32xf32>
    %154 = arith.negf %153 : vector<2x32xf32>
    %155 = math.exp %154 : vector<2x32xf32>
    %cst_72 = arith.constant 1.000000e+00 : f32
    %156 = vector.broadcast %cst_72 : f32 to vector<2x32xf32>
    %157 = arith.addf %156, %155 : vector<2x32xf32>
    %158 = arith.divf %156, %157 : vector<2x32xf32>
    %159 = vector.extract_strided_slice %146 {offsets = [0, 64], sizes = [2, 32], strides = [1, 1]} : vector<2x128xf32> to vector<2x32xf32>
    %160 = math.tanh %159 : vector<2x32xf32>
    %161 = vector.extract_strided_slice %146 {offsets = [0, 96], sizes = [2, 32], strides = [1, 1]} : vector<2x128xf32> to vector<2x32xf32>
    %162 = arith.negf %161 : vector<2x32xf32>
    %163 = math.exp %162 : vector<2x32xf32>
    %cst_73 = arith.constant 1.000000e+00 : f32
    %164 = vector.broadcast %cst_73 : f32 to vector<2x32xf32>
    %165 = arith.addf %164, %163 : vector<2x32xf32>
    %166 = arith.divf %164, %165 : vector<2x32xf32>
    %167 = arith.mulf %158, %141 : vector<2x32xf32>
    %168 = arith.mulf %152, %160 : vector<2x32xf32>
    %169 = arith.addf %167, %168 : vector<2x32xf32>
    %170 = math.tanh %169 : vector<2x32xf32>
    %171 = arith.mulf %166, %170 : vector<2x32xf32>
    %c0_74 = arith.constant 0 : index
    %c0_75 = arith.constant 0 : index
    %172 = vector.load %arg11[%c0_74, %c0_75] : memref<32x12xf32, #tpu.memory_space<vmem>>, vector<32x12xf32>
    %cst_76 = arith.constant dense<0.000000e+00> : vector<2x12xf32>
    %173 = tpu.matmul %171, %172, %cst_76 {dimension_numbers = #tpu.dot_dimension_numbers<[1], [0], [0], [1], [0, 0, 1, 1], [], []>} : vector<2x32xf32>, vector<32x12xf32>, vector<2x12xf32> -> vector<2x12xf32>
    %c0_77 = arith.constant 0 : index
    %c0_78 = arith.constant 0 : index
    %174 = vector.load %arg12[%c0_77, %c0_78] : memref<1x12xf32, #tpu.memory_space<vmem>>, vector<1x12xf32>
    %175 = vector.broadcast %174 : vector<1x12xf32> to vector<2x12xf32>
    %176 = arith.addf %173, %175 : vector<2x12xf32>
    %c0_79 = arith.constant 0 : index
    %c0_80 = arith.constant 0 : index
    %177 = vector.load %arg13[%c0_79, %c0_80] : memref<2x12xf32, #tpu.memory_space<vmem>>, vector<2x12xf32>
    tpu.vector_store %arg13[%c0_79, %c0_80], %176 {strides = array<i32>} : memref<2x12xf32, #tpu.memory_space<vmem>>, vector<2x12xf32>,
    return
  }
  func.func @transform_0(%arg0: i32) -> (i32, i32) {
    %c0_i32 = arith.constant 0 : i32
    %c0_i32_0 = arith.constant 0 : i32
    return %arg0, %c0_i32 : i32, i32
  }
  func.func @transform_1(%arg0: i32) -> (i32, i32) {
    %c0_i32 = arith.constant 0 : i32
    %c0_i32_0 = arith.constant 0 : i32
    %c0_i32_1 = arith.constant 0 : i32
    return %c0_i32, %c0_i32_0 : i32, i32
  }
  func.func @transform_2(%arg0: i32) -> (i32, i32) {
    %c0_i32 = arith.constant 0 : i32
    %c0_i32_0 = arith.constant 0 : i32
    %c0_i32_1 = arith.constant 0 : i32
    return %c0_i32, %c0_i32_0 : i32, i32
  }
  func.func @transform_3(%arg0: i32) -> (i32, i32, i32) {
    %c0_i32 = arith.constant 0 : i32
    %c0_i32_0 = arith.constant 0 : i32
    %c0_i32_1 = arith.constant 0 : i32
    %c0_i32_2 = arith.constant 0 : i32
    return %c0_i32, %c0_i32_0, %c0_i32_1 : i32, i32, i32
  }
  func.func @transform_4(%arg0: i32) -> (i32, i32) {
    %c0_i32 = arith.constant 0 : i32
    %c0_i32_0 = arith.constant 0 : i32
    %c0_i32_1 = arith.constant 0 : i32
    return %c0_i32, %c0_i32_0 : i32, i32
  }
  func.func @transform_5(%arg0: i32) -> (i32, i32, i32) {
    %c0_i32 = arith.constant 0 : i32
    %c0_i32_0 = arith.constant 0 : i32
    %c0_i32_1 = arith.constant 0 : i32
    %c0_i32_2 = arith.constant 0 : i32
    return %c0_i32, %c0_i32_0, %c0_i32_1 : i32, i32, i32
  }
  func.func @transform_6(%arg0: i32) -> (i32, i32) {
    %c0_i32 = arith.constant 0 : i32
    %c0_i32_0 = arith.constant 0 : i32
    %c0_i32_1 = arith.constant 0 : i32
    return %c0_i32, %c0_i32_0 : i32, i32
  }
  func.func @transform_7(%arg0: i32) -> (i32, i32) {
    %c0_i32 = arith.constant 0 : i32
    %c0_i32_0 = arith.constant 0 : i32
    %c0_i32_1 = arith.constant 0 : i32
    return %c0_i32, %c0_i32_0 : i32, i32
  }
  func.func @transform_8(%arg0: i32) -> (i32, i32) {
    %c0_i32 = arith.constant 0 : i32
    %c0_i32_0 = arith.constant 0 : i32
    %c0_i32_1 = arith.constant 0 : i32
    return %c0_i32, %c0_i32_0 : i32, i32
  }
  func.func @transform_9(%arg0: i32) -> (i32, i32) {
    %c0_i32 = arith.constant 0 : i32
    %c0_i32_0 = arith.constant 0 : i32
    %c0_i32_1 = arith.constant 0 : i32
    return %c0_i32, %c0_i32_0 : i32, i32
  }
  func.func @transform_10(%arg0: i32) -> (i32, i32) {
    %c0_i32 = arith.constant 0 : i32
    %c0_i32_0 = arith.constant 0 : i32
    %c0_i32_1 = arith.constant 0 : i32
    return %c0_i32, %c0_i32_0 : i32, i32
  }
  func.func @transform_11(%arg0: i32) -> (i32, i32) {
    %c0_i32 = arith.constant 0 : i32
    %c0_i32_0 = arith.constant 0 : i32
    %c0_i32_1 = arith.constant 0 : i32
    return %c0_i32, %c0_i32_0 : i32, i32
  }
  func.func @transform_12(%arg0: i32) -> (i32, i32) {
    %c0_i32 = arith.constant 0 : i32
    %c0_i32_0 = arith.constant 0 : i32
    return %arg0, %c0_i32 : i32, i32
  }
}

</mosaic_0001>

<llo_original>
// kernel: tpu_custom_call.1
$region0: #{tpu_custom_call.1}
  #allocation0 [shape = 'u32[]', space=smem, size = 0x4, offset = 0x4, fixed_abs, tag = 'smem constant byte address 0x4 - core index']
  #allocation1 [shape = 'u32[144,128]{1,0:T(1,128)}', space=vmem, size = 0x12000, scoped, tag = 'internal scratch']
  #allocation2 [shape = 'f32[16,32]{1,0:T(8,128)}', space=vmem, size = 0x2000, scoped, tag = 'scratch operand']
  #allocation3 [shape = 'f32[8,128]{1,0:T(8,128)}', space=vmem, size = 0x1000, scoped, tag = 'scratch operand']
  %s0 = inlined_call_operand.vmem [shape: f32[16,6], index: 0, kind: input, shape index: {}]
  %s1 = inlined_call_operand.vmem [shape: f32[16,1], index: 1, kind: input, shape index: {}]
  %s2 = inlined_call_operand.vmem [shape: f32[16,1], index: 2, kind: input, shape index: {}]
  %s3 = inlined_call_operand.hbm [shape: f32[3,6,16], index: 3, kind: input, shape index: {}]
  %s4 = inlined_call_operand.hbm [shape: f32[1,16], index: 4, kind: input, shape index: {}]
  %s5 = inlined_call_operand.vmem [shape: f32[3,16,32], index: 5, kind: input, shape index: {}]
  %s6 = inlined_call_operand.hbm [shape: f32[1,32], index: 6, kind: input, shape index: {}]
  %s7 = inlined_call_operand.vmem [shape: f32[32,128], index: 7, kind: input, shape index: {}]
  %s8 = inlined_call_operand.vmem [shape: f32[32,128], index: 8, kind: input, shape index: {}]
  %s9 = inlined_call_operand.vmem [shape: f32[1,128], index: 9, kind: input, shape index: {}]
  %s10 = inlined_call_operand.vmem [shape: f32[32,12], index: 10, kind: input, shape index: {}]
  %s11 = inlined_call_operand.vmem [shape: f32[1,12], index: 11, kind: input, shape index: {}]
  %s12 = inlined_call_operand.hbm [shape: f32[2,12], index: 12, kind: output, shape index: {}]
  %s13 = sld [smem:[#allocation0]]
  $region70: #{tpu_custom_call.1} parent=0
    _
  %s15 = ssub.s32 1, %s13
  %s16 = scalar_select 0, %s15, %s13
  $region1: #{tpu_custom_call.1} parent=0
    #allocation4 [shape = 'u8[12288]{0}', space=vmem, size = 0x3000, scoped, tag = 'input window, operand 3, single buffered']
    #allocation5 [shape = 's32[1]{0}', space=sflag, size = 0x4, scoped, tag = 'scoped memory for tpu_custom_call.1']
    #allocation6 [shape = 's32[1]{0}', space=sflag, size = 0x4, scoped, tag = 'scoped memory for tpu_custom_call.1']
    #allocation7 [shape = 'u8[512]{0}', space=vmem, size = 0x400, scoped, tag = 'input window, operand 4, single buffered']
    #allocation8 [shape = 's32[1]{0}', space=sflag, size = 0x4, scoped, tag = 'scoped memory for tpu_custom_call.1']
    #allocation9 [shape = 'u8[512]{0}', space=vmem, size = 0x400, scoped, tag = 'input window, operand 6, single buffered']
    #allocation10 [shape = 'u8[1024]{0}', space=vmem, size = 0x400, scoped, tag = 'output window, operand 0, single buffered']
    %17 = vsyncpa [#allocation5], 0
    %18 = vsyncpa [#allocation8], 0
    %19 = vsyncpa [#allocation6], 0
    // Predicated region
    $region2: #{tpu_custom_call.1} parent=1 // pred_check
      _
    $region3: #{tpu_custom_call.1} parent=1 // pred_check_branch
      %21 = sbr.rel (0) target = $region5
    $region4: #{tpu_custom_call.1} parent=1 // pred_region
      _
    $region5: #{tpu_custom_call.1} parent=1 // pred_fallthru
      _
    // Predicated region
    $region6: #{tpu_custom_call.1} parent=1 // pred_check
      _
    $region7: #{tpu_custom_call.1} parent=1 // pred_check_branch
      %23 = sbr.rel (0) target = $region9
    $region8: #{tpu_custom_call.1} parent=1 // pred_region
      _
    $region9: #{tpu_custom_call.1} parent=1 // pred_fallthru
      _
    // Predicated region
    $region10: #{tpu_custom_call.1} parent=1 // pred_check
      _
    $region11: #{tpu_custom_call.1} parent=1 // pred_check_branch
      %25 = sbr.rel (0) target = $region13
    $region12: #{tpu_custom_call.1} parent=1 // pred_region
      _
    $region13: #{tpu_custom_call.1} parent=1 // pred_fallthru
      _
    // Predicated region
    $region14: #{tpu_custom_call.1} parent=1 // pred_check
      _
    $region15: #{tpu_custom_call.1} parent=1 // pred_check_branch
      %27 = sbr.rel (0) target = $region17
    $region16: #{tpu_custom_call.1} parent=1 // pred_region
      %s29 = ssub.s32 384, 384
      %30 = vsyncadd [#allocation5], %s29
      %s31 = sshll.u32 [#allocation4], 4
      %s32 = int_to_ptr.vmem [resolvable:$true] %s31
      %37 = dma.hbm_to_vmem [thread:$0]  %s3, 384, %s32, [#allocation5], 128, 128, 8
    $region17: #{tpu_custom_call.1} parent=1 // pred_fallthru
      _
    // Predicated region
    $region18: #{tpu_custom_call.1} parent=1 // pred_check
      _
    $region19: #{tpu_custom_call.1} parent=1 // pred_check_branch
      %39 = sbr.rel (0) target = $region21
    $region20: #{tpu_custom_call.1} parent=1 // pred_region
      %s41 = ssub.s32 16, 16
      %42 = vsyncadd [#allocation8], %s41
      %s44 = sshll.u32 [#allocation7], 4
      %s45 = int_to_ptr.vmem [resolvable:$true] %s44
      %47 = dma.hbm_to_vmem [thread:$0]  %s4, 16, %s45, [#allocation8]
    $region21: #{tpu_custom_call.1} parent=1 // pred_fallthru
      _
    // Predicated region
    $region22: #{tpu_custom_call.1} parent=1 // pred_check
      _
    $region23: #{tpu_custom_call.1} parent=1 // pred_check_branch
      %49 = sbr.rel (0) target = $region25
    $region24: #{tpu_custom_call.1} parent=1 // pred_region
      _
    $region25: #{tpu_custom_call.1} parent=1 // pred_fallthru
      _
    // Predicated region
    $region26: #{tpu_custom_call.1} parent=1 // pred_check
      _
    $region27: #{tpu_custom_call.1} parent=1 // pred_check_branch
      %51 = sbr.rel (0) target = $region29
    $region28: #{tpu_custom_call.1} parent=1 // pred_region
      %s53 = ssub.s32 16, 16
      %54 = vsyncadd [#allocation8], %s53
      %s56 = sshll.u32 [#allocation9], 4
      %s57 = int_to_ptr.vmem [resolvable:$true] %s56
      %59 = dma.hbm_to_vmem [thread:$0]  %s6, 16, %s57, [#allocation8]
    $region29: #{tpu_custom_call.1} parent=1 // pred_fallthru
      _
    // Predicated region
    $region30: #{tpu_custom_call.1} parent=1 // pred_check
      _
    $region31: #{tpu_custom_call.1} parent=1 // pred_check_branch
      %61 = sbr.rel (0) target = $region33
    $region32: #{tpu_custom_call.1} parent=1 // pred_region
      _
    $region33: #{tpu_custom_call.1} parent=1 // pred_fallthru
      _
    // Predicated region
    $region34: #{tpu_custom_call.1} parent=1 // pred_check
      _
    $region35: #{tpu_custom_call.1} parent=1 // pred_check_branch
      %63 = sbr.rel (0) target = $region37
    $region36: #{tpu_custom_call.1} parent=1 // pred_region
      _
    $region37: #{tpu_custom_call.1} parent=1 // pred_fallthru
      _
    // Predicated region
    $region38: #{tpu_custom_call.1} parent=1 // pred_check
      _
    $region39: #{tpu_custom_call.1} parent=1 // pred_check_branch
      %65 = sbr.rel (0) target = $region41
    $region40: #{tpu_custom_call.1} parent=1 // pred_region
      _
    $region41: #{tpu_custom_call.1} parent=1 // pred_fallthru
      _
    // Predicated region
    $region42: #{tpu_custom_call.1} parent=1 // pred_check
      _
    $region43: #{tpu_custom_call.1} parent=1 // pred_check_branch
      %67 = sbr.rel (0) target = $region45
    $region44: #{tpu_custom_call.1} parent=1 // pred_region
      _
    $region45: #{tpu_custom_call.1} parent=1 // pred_fallthru
      _
    // Predicated region
    $region46: #{tpu_custom_call.1} parent=1 // pred_check
      _
    $region47: #{tpu_custom_call.1} parent=1 // pred_check_branch
      %69 = sbr.rel (0) target = $region49
    $region48: #{tpu_custom_call.1} parent=1 // pred_region
      _
    $region49: #{tpu_custom_call.1} parent=1 // pred_fallthru
      _
    // Predicated region
    $region50: #{tpu_custom_call.1} parent=1 // pred_check
      _
    $region51: #{tpu_custom_call.1} parent=1 // pred_check_branch
      %71 = sbr.rel (0) target = $region53
    $region52: #{tpu_custom_call.1} parent=1 // pred_region
      %72 = dma.done [#allocation5], 384
    $region53: #{tpu_custom_call.1} parent=1 // pred_fallthru
      _
    // Predicated region
    $region54: #{tpu_custom_call.1} parent=1 // pred_check
      _
    $region55: #{tpu_custom_call.1} parent=1 // pred_check_branch
      %74 = sbr.rel (0) target = $region57
    $region56: #{tpu_custom_call.1} parent=1 // pred_region
      %75 = dma.done [#allocation8], 16
    $region57: #{tpu_custom_call.1} parent=1 // pred_fallthru
      _
    // Predicated region
    $region58: #{tpu_custom_call.1} parent=1 // pred_check
      _
    $region59: #{tpu_custom_call.1} parent=1 // pred_check_branch
      %77 = sbr.rel (0) target = $region61
    $region60: #{tpu_custom_call.1} parent=1 // pred_region
      %78 = dma.done [#allocation8], 16
    $region61: #{tpu_custom_call.1} parent=1 // pred_fallthru
      _
    %v79 = vld [vmem:[%s1] sm:$0xff]
    %v80 = vld [vmem:[%s1 + $0x8] sm:$0xff]
    %v81 = vld [vmem:[%s2] sm:$0xff]
    %v82 = vld [vmem:[%s2 + $0x8] sm:$0xff]
    %v83 = vld [vmem:[%s0] sm:$0xff]
    %v84 = vld [vmem:[%s0 + $0x8] sm:$0xff]
    %v85 = vrot.slane %v83, 7
    %v86 = vrot.slane %v84, 7
    %v87 = vlaneseq
    %v88 = vshrl.u32 %v87, 7
    %vm89 = vcmp.lt.s32.totalorder %v88, 1
    %v90 = vsel %vm89, %v85, %v86
    %v91 = vsel %vm89, %v86, %v85
    %93 = vset.pattern.permute.xlu0 0
    %94 = vperm.xlu0 %93, %v79
    %v95 = vpop.permute.xlu0 %94
    %98 = vset.pattern.permute.xlu0 0
    %99 = vperm.xlu0 %98, %v80
    %v100 = vpop.permute.xlu0 %99
    %v102 = vmul.f32 %v91, %v95
    %v103 = vmul.f32 %v90, %v100
    %v104 = vrot.slane %v83, 1
    %v105 = vrot.slane %v84, 1
    %vm106 = vcmp.lt.s32.totalorder %v88, 7
    %v107 = vsel %vm106, %v104, %v105
    %v108 = vsel %vm106, %v105, %v104
    %110 = vset.pattern.permute.xlu0 0
    %111 = vperm.xlu0 %110, %v81
    %v112 = vpop.permute.xlu0 %111
    %115 = vset.pattern.permute.xlu0 0
    %116 = vperm.xlu0 %115, %v82
    %v117 = vpop.permute.xlu0 %116
    %v119 = vmul.f32 %v107, %v112
    %v120 = vmul.f32 %v108, %v117
    %v121 = vld [vmem:[#allocation4] sm:$0x3f]
    %s122 = scalar_lea.vmem [#allocation4], 8
    %v123 = vld [vmem:[%s122] sm:$0x3f]
    %vm124 = vcmask 48128
    %v126 = vsel %vm124, %v83, 0
    %v129 = vsel %vm124, %v84, 0
    %vm131 = vcmask 1045504
    %v133 = vsel %vm131, %v123, 0
    %135 = vmatprep.subr.mxu0 0.0
    %136 = vmatpush1.msra.mxu0 %v133
    %137 = vmatprep.subr.mxu0 0.0
    %138 = vmatpush1.msra.mxu0 0.0
    %139 = vmatprep.subr.mxu0 0.0
    %140 = vmatpush1.msra.mxu0 0.0
    %141 = vmatprep.subr.mxu0 0.0
    %142 = vmatpush1.msra.mxu0 0.0
    %143 = vmatprep.subr.mxu0 0.0
    %144 = vmatpush1.msra.mxu0 0.0
    %145 = vmatprep.subr.mxu0 0.0
    %146 = vmatpush1.msra.mxu0 0.0
    %147 = vmatprep.subr.mxu0 0.0
    %148 = vmatpush1.msra.mxu0 0.0
    %149 = vmatprep.subr.mxu0 0.0
    %150 = vmatpush1.msra.mxu0 0.0
    %151 = vmatprep.subr.mxu0 0.0
    %152 = vmatpush1.msra.mxu0 0.0
    %153 = vmatprep.subr.mxu0 0.0
    %154 = vmatpush1.msra.mxu0 0.0
    %155 = vmatprep.subr.mxu0 0.0
    %156 = vmatpush1.msra.mxu0 0.0
    %157 = vmatprep.subr.mxu0 0.0
    %158 = vmatpush1.msra.mxu0 0.0
    %159 = vmatprep.subr.mxu0 0.0
    %160 = vmatpush1.msra.mxu0 0.0
    %161 = vmatprep.subr.mxu0 0.0
    %162 = vmatpush1.msra.mxu0 0.0
    %163 = vmatprep.subr.mxu0 0.0
    %164 = vmatpush1.msra.mxu0 0.0
    %165 = vmatprep.subr.mxu0 0.0
    %166 = vmatpush1.msra.mxu0 0.0
    %167 = vmatprep.subr.mxu0 0.0
    %168 = vmatpush1.msra.mxu0 0.0
    %169 = vmatprep.subr.mxu0 0.0
    %170 = vmatpush1.msra.mxu0 0.0
    %171 = vmatprep.subr.mxu0 0.0
    %172 = vmatpush1.msra.mxu0 0.0
    %173 = vmatprep.subr.mxu0 0.0
    %174 = vmatpush1.msra.mxu0 0.0
    %175 = vmatprep.subr.mxu0 0.0
    %176 = vmatpush1.msra.mxu0 0.0
    %177 = vmatprep.subr.mxu0 0.0
    %178 = vmatpush1.msra.mxu0 0.0
    %179 = vmatprep.subr.mxu0 0.0
    %180 = vmatpush1.msra.mxu0 0.0
    %181 = vmatprep.subr.mxu0 0.0
    %182 = vmatpush1.msra.mxu0 0.0
    %183 = vmatprep.subr.mxu0 0.0
    %184 = vmatpush1.msra.mxu0 0.0
    %185 = vmatprep.subr.mxu0 0.0
    %186 = vmatpush1.msra.mxu0 0.0
    %187 = vmatprep.subr.mxu0 0.0
    %188 = vmatpush1.msra.mxu0 0.0
    %189 = vmatprep.subr.mxu0 0.0
    %190 = vmatpush1.msra.mxu0 0.0
    %191 = vmatprep.subr.mxu0 0.0
    %192 = vmatpush1.msra.mxu0 0.0
    %193 = vmatprep.subr.mxu0 0.0
    %194 = vmatpush1.msra.mxu0 0.0
    %195 = vmatprep.subr.mxu0 0.0
    %196 = vmatpush1.msra.mxu0 0.0
    %197 = vmatprep.subr.mxu0 0.0
    %198 = vmatpush1.msra.mxu0 0.0
    %199 = vmatprep.mubr.f32.mxu0 0.0
    %200 = vmatmul.mubr.f32.gmra.mrb[0].mxu0 %v126
    %v201 = vpop.f32.mrb[0].mxu0
    %v202 = vadd.f32 0.0, %v201
    %v203 = vpop.f32.mrb[0].mxu0
    %204 = vmatprep.mubr.f32.mxu0 0.0
    %205 = vmatmul.mubr.f32.gmra.mrb[0].mxu0 %v129
    %v206 = vpop.f32.mrb[0].mxu0
    %v207 = vadd.f32 0.0, %v206
    %v208 = vpop.f32.mrb[0].mxu0
    %209 = vdwg.mxu0
    %v211 = vsel %vm124, %v102, 0
    %v214 = vsel %vm124, %v103, 0
    %v217 = vsel %vm131, %v121, 0
    %219 = vmatprep.subr.mxu0 0.0
    %220 = vmatpush1.msra.mxu0 %v217
    %221 = vmatprep.subr.mxu0 0.0
    %222 = vmatpush1.msra.mxu0 0.0
    %223 = vmatprep.subr.mxu0 0.0
    %224 = vmatpush1.msra.mxu0 0.0
    %225 = vmatprep.subr.mxu0 0.0
    %226 = vmatpush1.msra.mxu0 0.0
    %227 = vmatprep.subr.mxu0 0.0
    %228 = vmatpush1.msra.mxu0 0.0
    %229 = vmatprep.subr.mxu0 0.0
    %230 = vmatpush1.msra.mxu0 0.0
    %231 = vmatprep.subr.mxu0 0.0
    %232 = vmatpush1.msra.mxu0 0.0
    %233 = vmatprep.subr.mxu0 0.0
    %234 = vmatpush1.msra.mxu0 0.0
    %235 = vmatprep.subr.mxu0 0.0
    %236 = vmatpush1.msra.mxu0 0.0
    %237 = vmatprep.subr.mxu0 0.0
    %238 = vmatpush1.msra.mxu0 0.0
    %239 = vmatprep.subr.mxu0 0.0
    %240 = vmatpush1.msra.mxu0 0.0
    %241 = vmatprep.subr.mxu0 0.0
    %242 = vmatpush1.msra.mxu0 0.0
    %243 = vmatprep.subr.mxu0 0.0
    %244 = vmatpush1.msra.mxu0 0.0
    %245 = vmatprep.subr.mxu0 0.0
    %246 = vmatpush1.msra.mxu0 0.0
    %247 = vmatprep.subr.mxu0 0.0
    %248 = vmatpush1.msra.mxu0 0.0
    %249 = vmatprep.subr.mxu0 0.0
    %250 = vmatpush1.msra.mxu0 0.0
    %251 = vmatprep.subr.mxu0 0.0
    %252 = vmatpush1.msra.mxu0 0.0
    %253 = vmatprep.subr.mxu0 0.0
    %254 = vmatpush1.msra.mxu0 0.0
    %255 = vmatprep.subr.mxu0 0.0
    %256 = vmatpush1.msra.mxu0 0.0
    %257 = vmatprep.subr.mxu0 0.0
    %258 = vmatpush1.msra.mxu0 0.0
    %259 = vmatprep.subr.mxu0 0.0
    %260 = vmatpush1.msra.mxu0 0.0
    %261 = vmatprep.subr.mxu0 0.0
    %262 = vmatpush1.msra.mxu0 0.0
    %263 = vmatprep.subr.mxu0 0.0
    %264 = vmatpush1.msra.mxu0 0.0
    %265 = vmatprep.subr.mxu0 0.0
    %266 = vmatpush1.msra.mxu0 0.0
    %267 = vmatprep.subr.mxu0 0.0
    %268 = vmatpush1.msra.mxu0 0.0
    %269 = vmatprep.subr.mxu0 0.0
    %270 = vmatpush1.msra.mxu0 0.0
    %271 = vmatprep.subr.mxu0 0.0
    %272 = vmatpush1.msra.mxu0 0.0
    %273 = vmatprep.subr.mxu0 0.0
    %274 = vmatpush1.msra.mxu0 0.0
    %275 = vmatprep.subr.mxu0 0.0
    %276 = vmatpush1.msra.mxu0 0.0
    %277 = vmatprep.subr.mxu0 0.0
    %278 = vmatpush1.msra.mxu0 0.0
    %279 = vmatprep.subr.mxu0 0.0
    %280 = vmatpush1.msra.mxu0 0.0
    %281 = vmatprep.subr.mxu0 0.0
    %282 = vmatpush1.msra.mxu0 0.0
    %283 = vmatprep.mubr.f32.mxu0 0.0
    %284 = vmatmul.mubr.f32.gmra.mrb[0].mxu0 %v211
    %v285 = vpop.f32.mrb[0].mxu0
    %v286 = vadd.f32 %v202, %v285
    %v287 = vpop.f32.mrb[0].mxu0
    %288 = vmatprep.mubr.f32.mxu0 0.0
    %289 = vmatmul.mubr.f32.gmra.mrb[0].mxu0 %v214
    %v290 = vpop.f32.mrb[0].mxu0
    %v291 = vadd.f32 %v207, %v290
    %v292 = vpop.f32.mrb[0].mxu0
    %293 = vdwg.mxu0
    %s294 = scalar_lea.vmem [#allocation4], 16
    %v295 = vld [vmem:[%s294] sm:$0x3f]
    %v297 = vsel %vm124, %v119, 0
    %v300 = vsel %vm124, %v120, 0
    %v303 = vsel %vm131, %v295, 0
    %305 = vmatprep.subr.mxu0 0.0
    %306 = vmatpush1.msra.mxu0 %v303
    %307 = vmatprep.subr.mxu0 0.0
    %308 = vmatpush1.msra.mxu0 0.0
    %309 = vmatprep.subr.mxu0 0.0
    %310 = vmatpush1.msra.mxu0 0.0
    %311 = vmatprep.subr.mxu0 0.0
    %312 = vmatpush1.msra.mxu0 0.0
    %313 = vmatprep.subr.mxu0 0.0
    %314 = vmatpush1.msra.mxu0 0.0
    %315 = vmatprep.subr.mxu0 0.0
    %316 = vmatpush1.msra.mxu0 0.0
    %317 = vmatprep.subr.mxu0 0.0
    %318 = vmatpush1.msra.mxu0 0.0
    %319 = vmatprep.subr.mxu0 0.0
    %320 = vmatpush1.msra.mxu0 0.0
    %321 = vmatprep.subr.mxu0 0.0
    %322 = vmatpush1.msra.mxu0 0.0
    %323 = vmatprep.subr.mxu0 0.0
    %324 = vmatpush1.msra.mxu0 0.0
    %325 = vmatprep.subr.mxu0 0.0
    %326 = vmatpush1.msra.mxu0 0.0
    %327 = vmatprep.subr.mxu0 0.0
    %328 = vmatpush1.msra.mxu0 0.0
    %329 = vmatprep.subr.mxu0 0.0
    %330 = vmatpush1.msra.mxu0 0.0
    %331 = vmatprep.subr.mxu0 0.0
    %332 = vmatpush1.msra.mxu0 0.0
    %333 = vmatprep.subr.mxu0 0.0
    %334 = vmatpush1.msra.mxu0 0.0
    %335 = vmatprep.subr.mxu0 0.0
    %336 = vmatpush1.msra.mxu0 0.0
    %337 = vmatprep.subr.mxu0 0.0
    %338 = vmatpush1.msra.mxu0 0.0
    %339 = vmatprep.subr.mxu0 0.0
    %340 = vmatpush1.msra.mxu0 0.0
    %341 = vmatprep.subr.mxu0 0.0
    %342 = vmatpush1.msra.mxu0 0.0
    %343 = vmatprep.subr.mxu0 0.0
    %344 = vmatpush1.msra.mxu0 0.0
    %345 = vmatprep.subr.mxu0 0.0
    %346 = vmatpush1.msra.mxu0 0.0
    %347 = vmatprep.subr.mxu0 0.0
    %348 = vmatpush1.msra.mxu0 0.0
    %349 = vmatprep.subr.mxu0 0.0
    %350 = vmatpush1.msra.mxu0 0.0
    %351 = vmatprep.subr.mxu0 0.0
    %352 = vmatpush1.msra.mxu0 0.0
    %353 = vmatprep.subr.mxu0 0.0
    %354 = vmatpush1.msra.mxu0 0.0
    %355 = vmatprep.subr.mxu0 0.0
    %356 = vmatpush1.msra.mxu0 0.0
    %357 = vmatprep.subr.mxu0 0.0
    %358 = vmatpush1.msra.mxu0 0.0
    %359 = vmatprep.subr.mxu0 0.0
    %360 = vmatpush1.msra.mxu0 0.0
    %361 = vmatprep.subr.mxu0 0.0
    %362 = vmatpush1.msra.mxu0 0.0
    %363 = vmatprep.subr.mxu0 0.0
    %364 = vmatpush1.msra.mxu0 0.0
    %365 = vmatprep.subr.mxu0 0.0
    %366 = vmatpush1.msra.mxu0 0.0
    %367 = vmatprep.subr.mxu0 0.0
    %368 = vmatpush1.msra.mxu0 0.0
    %369 = vmatprep.mubr.f32.mxu0 0.0
    %370 = vmatmul.mubr.f32.gmra.mrb[0].mxu0 %v297
    %v371 = vpop.f32.mrb[0].mxu0
    %v372 = vadd.f32 0.0, %v371
    %v373 = vpop.f32.mrb[0].mxu0
    %374 = vmatprep.mubr.f32.mxu0 0.0
    %375 = vmatmul.mubr.f32.gmra.mrb[0].mxu0 %v300
    %v376 = vpop.f32.mrb[0].mxu0
    %v377 = vadd.f32 0.0, %v376
    %v378 = vpop.f32.mrb[0].mxu0
    %379 = vdwg.mxu0
    %v380 = vadd.f32 %v286, %v372
    %v381 = vadd.f32 %v291, %v377
    %v382 = vld [vmem:[#allocation7] sm:$0x1]
    %v384 = vlaneseq
    %v385 = vshrl.u32 %v384, 7
    %v386 = vsub.s32 0, %v385
    %v387 = vrot.slane %v382, %v386
    %v389 = vadd.f32 %v380, %v387
    %v390 = vadd.f32 %v381, %v387
    %v391 = vmax.f32 %v389, 0.0
    %v392 = vmax.f32 %v390, 0.0
    %v393 = vrot.slane %v391, 7
    %v394 = vrot.slane %v392, 7
    %v395 = vsel %vm89, %v393, %v394
    %v396 = vsel %vm89, %v394, %v393
    %v397 = vmul.f32 %v396, %v95
    %v398 = vmul.f32 %v395, %v100
    %v399 = vrot.slane %v391, 1
    %v400 = vrot.slane %v392, 1
    %v401 = vsel %vm106, %v399, %v400
    %v402 = vsel %vm106, %v400, %v399
    %v403 = vmul.f32 %v401, %v112
    %v404 = vmul.f32 %v402, %v117
    %v405 = vld [vmem:[%s5] sm:$0xff]
    %v406 = vld [vmem:[%s5 + $0x8] sm:$0xff]
    %s407 = scalar_lea.vmem %s5, 16
    %v408 = vld [vmem:[%s407] sm:$0xff]
    %v409 = vld [vmem:[%s407 + $0x8] sm:$0xff]
    %vm410 = vcmask 130048
    %v412 = vsel %vm410, %v391, 0
    %v415 = vsel %vm410, %v392, 0
    %417 = vmatprep.subr.mxu0 0.0
    %418 = vmatpush1.msra.mxu0 %v408
    %419 = vmatprep.subr.mxu0 0.0
    %420 = vmatpush1.msra.mxu0 %v409
    %421 = vmatprep.subr.mxu0 0.0
    %422 = vmatpush1.msra.mxu0 0.0
    %423 = vmatprep.subr.mxu0 0.0
    %424 = vmatpush1.msra.mxu0 0.0
    %425 = vmatprep.subr.mxu0 0.0
    %426 = vmatpush1.msra.mxu0 0.0
    %427 = vmatprep.subr.mxu0 0.0
    %428 = vmatpush1.msra.mxu0 0.0
    %429 = vmatprep.subr.mxu0 0.0
    %430 = vmatpush1.msra.mxu0 0.0
    %431 = vmatprep.subr.mxu0 0.0
    %432 = vmatpush1.msra.mxu0 0.0
    %433 = vmatprep.subr.mxu0 0.0
    %434 = vmatpush1.msra.mxu0 0.0
    %435 = vmatprep.subr.mxu0 0.0
    %436 = vmatpush1.msra.mxu0 0.0
    %437 = vmatprep.subr.mxu0 0.0
    %438 = vmatpush1.msra.mxu0 0.0
    %439 = vmatprep.subr.mxu0 0.0
    %440 = vmatpush1.msra.mxu0 0.0
    %441 = vmatprep.subr.mxu0 0.0
    %442 = vmatpush1.msra.mxu0 0.0
    %443 = vmatprep.subr.mxu0 0.0
    %444 = vmatpush1.msra.mxu0 0.0
    %445 = vmatprep.subr.mxu0 0.0
    %446 = vmatpush1.msra.mxu0 0.0
    %447 = vmatprep.subr.mxu0 0.0
    %448 = vmatpush1.msra.mxu0 0.0
    %449 = vmatprep.subr.mxu0 0.0
    %450 = vmatpush1.msra.mxu0 0.0
    %451 = vmatprep.subr.mxu0 0.0
    %452 = vmatpush1.msra.mxu0 0.0
    %453 = vmatprep.subr.mxu0 0.0
    %454 = vmatpush1.msra.mxu0 0.0
    %455 = vmatprep.subr.mxu0 0.0
    %456 = vmatpush1.msra.mxu0 0.0
    %457 = vmatprep.subr.mxu0 0.0
    %458 = vmatpush1.msra.mxu0 0.0
    %459 = vmatprep.subr.mxu0 0.0
    %460 = vmatpush1.msra.mxu0 0.0
    %461 = vmatprep.subr.mxu0 0.0
    %462 = vmatpush1.msra.mxu0 0.0
    %463 = vmatprep.subr.mxu0 0.0
    %464 = vmatpush1.msra.mxu0 0.0
    %465 = vmatprep.subr.mxu0 0.0
    %466 = vmatpush1.msra.mxu0 0.0
    %467 = vmatprep.subr.mxu0 0.0
    %468 = vmatpush1.msra.mxu0 0.0
    %469 = vmatprep.subr.mxu0 0.0
    %470 = vmatpush1.msra.mxu0 0.0
    %471 = vmatprep.subr.mxu0 0.0
    %472 = vmatpush1.msra.mxu0 0.0
    %473 = vmatprep.subr.mxu0 0.0
    %474 = vmatpush1.msra.mxu0 0.0
    %475 = vmatprep.subr.mxu0 0.0
    %476 = vmatpush1.msra.mxu0 0.0
    %477 = vmatprep.subr.mxu0 0.0
    %478 = vmatpush1.msra.mxu0 0.0
    %479 = vmatprep.subr.mxu0 0.0
    %480 = vmatpush1.msra.mxu0 0.0
    %481 = vmatprep.mubr.f32.mxu0 0.0
    %482 = vmatmul.mubr.f32.gmra.mrb[0].mxu0 %v412
    %v483 = vpop.f32.mrb[0].mxu0
    %v484 = vadd.f32 0.0, %v483
    %v485 = vpop.f32.mrb[0].mxu0
    %486 = vmatprep.mubr.f32.mxu0 0.0
    %487 = vmatmul.mubr.f32.gmra.mrb[0].mxu0 %v415
    %v488 = vpop.f32.mrb[0].mxu0
    %v489 = vadd.f32 0.0, %v488
    %v490 = vpop.f32.mrb[0].mxu0
    %491 = vdwg.mxu0
    %v493 = vsel %vm410, %v397, 0
    %v496 = vsel %vm410, %v398, 0
    %498 = vmatprep.subr.mxu0 0.0
    %499 = vmatpush1.msra.mxu0 %v405
    %500 = vmatprep.subr.mxu0 0.0
    %501 = vmatpush1.msra.mxu0 %v406
    %502 = vmatprep.subr.mxu0 0.0
    %503 = vmatpush1.msra.mxu0 0.0
    %504 = vmatprep.subr.mxu0 0.0
    %505 = vmatpush1.msra.mxu0 0.0
    %506 = vmatprep.subr.mxu0 0.0
    %507 = vmatpush1.msra.mxu0 0.0
    %508 = vmatprep.subr.mxu0 0.0
    %509 = vmatpush1.msra.mxu0 0.0
    %510 = vmatprep.subr.mxu0 0.0
    %511 = vmatpush1.msra.mxu0 0.0
    %512 = vmatprep.subr.mxu0 0.0
    %513 = vmatpush1.msra.mxu0 0.0
    %514 = vmatprep.subr.mxu0 0.0
    %515 = vmatpush1.msra.mxu0 0.0
    %516 = vmatprep.subr.mxu0 0.0
    %517 = vmatpush1.msra.mxu0 0.0
    %518 = vmatprep.subr.mxu0 0.0
    %519 = vmatpush1.msra.mxu0 0.0
    %520 = vmatprep.subr.mxu0 0.0
    %521 = vmatpush1.msra.mxu0 0.0
    %522 = vmatprep.subr.mxu0 0.0
    %523 = vmatpush1.msra.mxu0 0.0
    %524 = vmatprep.subr.mxu0 0.0
    %525 = vmatpush1.msra.mxu0 0.0
    %526 = vmatprep.subr.mxu0 0.0
    %527 = vmatpush1.msra.mxu0 0.0
    %528 = vmatprep.subr.mxu0 0.0
    %529 = vmatpush1.msra.mxu0 0.0
    %530 = vmatprep.subr.mxu0 0.0
    %531 = vmatpush1.msra.mxu0 0.0
    %532 = vmatprep.subr.mxu0 0.0
    %533 = vmatpush1.msra.mxu0 0.0
    %534 = vmatprep.subr.mxu0 0.0
    %535 = vmatpush1.msra.mxu0 0.0
    %536 = vmatprep.subr.mxu0 0.0
    %537 = vmatpush1.msra.mxu0 0.0
    %538 = vmatprep.subr.mxu0 0.0
    %539 = vmatpush1.msra.mxu0 0.0
    %540 = vmatprep.subr.mxu0 0.0
    %541 = vmatpush1.msra.mxu0 0.0
    %542 = vmatprep.subr.mxu0 0.0
    %543 = vmatpush1.msra.mxu0 0.0
    %544 = vmatprep.subr.mxu0 0.0
    %545 = vmatpush1.msra.mxu0 0.0
    %546 = vmatprep.subr.mxu0 0.0
    %547 = vmatpush1.msra.mxu0 0.0
    %548 = vmatprep.subr.mxu0 0.0
    %549 = vmatpush1.msra.mxu0 0.0
    %550 = vmatprep.subr.mxu0 0.0
    %551 = vmatpush1.msra.mxu0 0.0
    %552 = vmatprep.subr.mxu0 0.0
    %553 = vmatpush1.msra.mxu0 0.0
    %554 = vmatprep.subr.mxu0 0.0
    %555 = vmatpush1.msra.mxu0 0.0
    %556 = vmatprep.subr.mxu0 0.0
    %557 = vmatpush1.msra.mxu0 0.0
    %558 = vmatprep.subr.mxu0 0.0
    %559 = vmatpush1.msra.mxu0 0.0
    %560 = vmatprep.subr.mxu0 0.0
    %561 = vmatpush1.msra.mxu0 0.0
    %562 = vmatprep.mubr.f32.mxu0 0.0
    %563 = vmatmul.mubr.f32.gmra.mrb[0].mxu0 %v493
    %v564 = vpop.f32.mrb[0].mxu0
    %v565 = vadd.f32 %v484, %v564
    %v566 = vpop.f32.mrb[0].mxu0
    %567 = vmatprep.mubr.f32.mxu0 0.0
    %568 = vmatmul.mubr.f32.gmra.mrb[0].mxu0 %v496
    %v569 = vpop.f32.mrb[0].mxu0
    %v570 = vadd.f32 %v489, %v569
    %v571 = vpop.f32.mrb[0].mxu0
    %572 = vdwg.mxu0
    %s573 = scalar_lea.vmem %s5, 32
    %v574 = vld [vmem:[%s573] sm:$0xff]
    %v575 = vld [vmem:[%s573 + $0x8] sm:$0xff]
    %v577 = vsel %vm410, %v403, 0
    %v580 = vsel %vm410, %v404, 0
    %582 = vmatprep.subr.mxu0 0.0
    %583 = vmatpush1.msra.mxu0 %v574
    %584 = vmatprep.subr.mxu0 0.0
    %585 = vmatpush1.msra.mxu0 %v575
    %586 = vmatprep.subr.mxu0 0.0
    %587 = vmatpush1.msra.mxu0 0.0
    %588 = vmatprep.subr.mxu0 0.0
    %589 = vmatpush1.msra.mxu0 0.0
    %590 = vmatprep.subr.mxu0 0.0
    %591 = vmatpush1.msra.mxu0 0.0
    %592 = vmatprep.subr.mxu0 0.0
    %593 = vmatpush1.msra.mxu0 0.0
    %594 = vmatprep.subr.mxu0 0.0
    %595 = vmatpush1.msra.mxu0 0.0
    %596 = vmatprep.subr.mxu0 0.0
    %597 = vmatpush1.msra.mxu0 0.0
    %598 = vmatprep.subr.mxu0 0.0
    %599 = vmatpush1.msra.mxu0 0.0
    %600 = vmatprep.subr.mxu0 0.0
    %601 = vmatpush1.msra.mxu0 0.0
    %602 = vmatprep.subr.mxu0 0.0
    %603 = vmatpush1.msra.mxu0 0.0
    %604 = vmatprep.subr.mxu0 0.0
    %605 = vmatpush1.msra.mxu0 0.0
    %606 = vmatprep.subr.mxu0 0.0
    %607 = vmatpush1.msra.mxu0 0.0
    %608 = vmatprep.subr.mxu0 0.0
    %609 = vmatpush1.msra.mxu0 0.0
    %610 = vmatprep.subr.mxu0 0.0
    %611 = vmatpush1.msra.mxu0 0.0
    %612 = vmatprep.subr.mxu0 0.0
    %613 = vmatpush1.msra.mxu0 0.0
    %614 = vmatprep.subr.mxu0 0.0
    %615 = vmatpush1.msra.mxu0 0.0
    %616 = vmatprep.subr.mxu0 0.0
    %617 = vmatpush1.msra.mxu0 0.0
    %618 = vmatprep.subr.mxu0 0.0
    %619 = vmatpush1.msra.mxu0 0.0
    %620 = vmatprep.subr.mxu0 0.0
    %621 = vmatpush1.msra.mxu0 0.0
    %622 = vmatprep.subr.mxu0 0.0
    %623 = vmatpush1.msra.mxu0 0.0
    %624 = vmatprep.subr.mxu0 0.0
    %625 = vmatpush1.msra.mxu0 0.0
    %626 = vmatprep.subr.mxu0 0.0
    %627 = vmatpush1.msra.mxu0 0.0
    %628 = vmatprep.subr.mxu0 0.0
    %629 = vmatpush1.msra.mxu0 0.0
    %630 = vmatprep.subr.mxu0 0.0
    %631 = vmatpush1.msra.mxu0 0.0
    %632 = vmatprep.subr.mxu0 0.0
    %633 = vmatpush1.msra.mxu0 0.0
    %634 = vmatprep.subr.mxu0 0.0
    %635 = vmatpush1.msra.mxu0 0.0
    %636 = vmatprep.subr.mxu0 0.0
    %637 = vmatpush1.msra.mxu0 0.0
    %638 = vmatprep.subr.mxu0 0.0
    %639 = vmatpush1.msra.mxu0 0.0
    %640 = vmatprep.subr.mxu0 0.0
    %641 = vmatpush1.msra.mxu0 0.0
    %642 = vmatprep.subr.mxu0 0.0
    %643 = vmatpush1.msra.mxu0 0.0
    %644 = vmatprep.subr.mxu0 0.0
    %645 = vmatpush1.msra.mxu0 0.0
    %646 = vmatprep.mubr.f32.mxu0 0.0
    %647 = vmatmul.mubr.f32.gmra.mrb[0].mxu0 %v577
    %v648 = vpop.f32.mrb[0].mxu0
    %v649 = vadd.f32 0.0, %v648
    %v650 = vpop.f32.mrb[0].mxu0
    %651 = vmatprep.mubr.f32.mxu0 0.0
    %652 = vmatmul.mubr.f32.gmra.mrb[0].mxu0 %v580
    %v653 = vpop.f32.mrb[0].mxu0
    %v654 = vadd.f32 0.0, %v653
    %v655 = vpop.f32.mrb[0].mxu0
    %656 = vdwg.mxu0
    %v657 = vadd.f32 %v565, %v649
    %v658 = vadd.f32 %v570, %v654
    %v659 = vld [vmem:[#allocation9] sm:$0x1]
    %v661 = vlaneseq
    %v662 = vshrl.u32 %v661, 7
    %v663 = vsub.s32 0, %v662
    %v664 = vrot.slane %v659, %v663
    %v666 = vadd.f32 %v657, %v664
    %v667 = vadd.f32 %v658, %v664
    %v668 = vmax.f32 %v666, 0.0
    %v669 = vmax.f32 %v667, 0.0
    %vm670 = vcmask 261120
    %671 = vst.msk [vmem:[#allocation2] sm:$0xff] %vm670, %v668
    %672 = vst.msk [vmem:[#allocation2 + $0x8] sm:$0xff] %vm670, %v669
    %v673 = vld [vmem:[#allocation2] ss:$2 sm:$0xff]
    %s674 = scalar_lea.vmem [#allocation2], 1
    %v675 = vld [vmem:[%s674] ss:$2 sm:$0xff]
    %v676 = vmax.f32 %v673, %v675
    %v677 = vld [vmem:[%s7] sm:$0xff]
    %v678 = vld [vmem:[%s7 + $0x8] sm:$0xff]
    %v679 = vld [vmem:[%s7 + $0x10] sm:$0xff]
    %v680 = vld [vmem:[%s7 + $0x18] sm:$0xff]
    %v681 = vld [vmem:[%s9] sm:$0x1]
    %v683 = vlaneseq
    %v684 = vshrl.u32 %v683, 7
    %v685 = vsub.s32 0, %v684
    %v686 = vrot.slane %v681, %v685
    %v689 = vsel %vm670, %v676, 0
    %691 = vmatprep.subr.mxu0 0.0
    %692 = vmatpush1.msra.mxu0 %v677
    %693 = vmatprep.subr.mxu0 0.0
    %694 = vmatpush1.msra.mxu0 %v678
    %695 = vmatprep.subr.mxu0 0.0
    %696 = vmatpush1.msra.mxu0 %v679
    %697 = vmatprep.subr.mxu0 0.0
    %698 = vmatpush1.msra.mxu0 %v680
    %699 = vmatprep.subr.mxu0 0.0
    %700 = vmatpush1.msra.mxu0 0.0
    %701 = vmatprep.subr.mxu0 0.0
    %702 = vmatpush1.msra.mxu0 0.0
    %703 = vmatprep.subr.mxu0 0.0
    %704 = vmatpush1.msra.mxu0 0.0
    %705 = vmatprep.subr.mxu0 0.0
    %706 = vmatpush1.msra.mxu0 0.0
    %707 = vmatprep.subr.mxu0 0.0
    %708 = vmatpush1.msra.mxu0 0.0
    %709 = vmatprep.subr.mxu0 0.0
    %710 = vmatpush1.msra.mxu0 0.0
    %711 = vmatprep.subr.mxu0 0.0
    %712 = vmatpush1.msra.mxu0 0.0
    %713 = vmatprep.subr.mxu0 0.0
    %714 = vmatpush1.msra.mxu0 0.0
    %715 = vmatprep.subr.mxu0 0.0
    %716 = vmatpush1.msra.mxu0 0.0
    %717 = vmatprep.subr.mxu0 0.0
    %718 = vmatpush1.msra.mxu0 0.0
    %719 = vmatprep.subr.mxu0 0.0
    %720 = vmatpush1.msra.mxu0 0.0
    %721 = vmatprep.subr.mxu0 0.0
    %722 = vmatpush1.msra.mxu0 0.0
    %723 = vmatprep.subr.mxu0 0.0
    %724 = vmatpush1.msra.mxu0 0.0
    %725 = vmatprep.subr.mxu0 0.0
    %726 = vmatpush1.msra.mxu0 0.0
    %727 = vmatprep.subr.mxu0 0.0
    %728 = vmatpush1.msra.mxu0 0.0
    %729 = vmatprep.subr.mxu0 0.0
    %730 = vmatpush1.msra.mxu0 0.0
    %731 = vmatprep.subr.mxu0 0.0
    %732 = vmatpush1.msra.mxu0 0.0
    %733 = vmatprep.subr.mxu0 0.0
    %734 = vmatpush1.msra.mxu0 0.0
    %735 = vmatprep.subr.mxu0 0.0
    %736 = vmatpush1.msra.mxu0 0.0
    %737 = vmatprep.subr.mxu0 0.0
    %738 = vmatpush1.msra.mxu0 0.0
    %739 = vmatprep.subr.mxu0 0.0
    %740 = vmatpush1.msra.mxu0 0.0
    %741 = vmatprep.subr.mxu0 0.0
    %742 = vmatpush1.msra.mxu0 0.0
    %743 = vmatprep.subr.mxu0 0.0
    %744 = vmatpush1.msra.mxu0 0.0
    %745 = vmatprep.subr.mxu0 0.0
    %746 = vmatpush1.msra.mxu0 0.0
    %747 = vmatprep.subr.mxu0 0.0
    %748 = vmatpush1.msra.mxu0 0.0
    %749 = vmatprep.subr.mxu0 0.0
    %750 = vmatpush1.msra.mxu0 0.0
    %751 = vmatprep.subr.mxu0 0.0
    %752 = vmatpush1.msra.mxu0 0.0
    %753 = vmatprep.subr.mxu0 0.0
    %754 = vmatpush1.msra.mxu0 0.0
    %755 = vmatprep.mubr.f32.mxu0 0.0
    %756 = vmatmul.mubr.f32.gmra.mrb[0].mxu0 %v689
    %v757 = vpop.f32.mrb[0].mxu0
    %v758 = vadd.f32 %v686, %v757
    %v759 = vpop.f32.mrb[0].mxu0
    %760 = vdwg.mxu0
    %761 = vst [vmem:[#allocation3] sm:$0xff] %v758
    %v762 = vld [vmem:[%s8] sm:$0xff]
    %v763 = vld [vmem:[%s8 + $0x8] sm:$0xff]
    %v764 = vld [vmem:[%s8 + $0x10] sm:$0xff]
    %v765 = vld [vmem:[%s8 + $0x18] sm:$0xff]
    %v766 = vld [vmem:[#allocation3] ss:$4 sm:$0x3]
    %v768 = vsel %vm670, 0.0, 0
    %770 = vmatprep.subr.mxu0 0.0
    %771 = vmatpush1.msra.mxu0 %v762
    %772 = vmatprep.subr.mxu0 0.0
    %773 = vmatpush1.msra.mxu0 %v763
    %774 = vmatprep.subr.mxu0 0.0
    %775 = vmatpush1.msra.mxu0 %v764
    %776 = vmatprep.subr.mxu0 0.0
    %777 = vmatpush1.msra.mxu0 %v765
    %778 = vmatprep.subr.mxu0 0.0
    %779 = vmatpush1.msra.mxu0 0.0
    %780 = vmatprep.subr.mxu0 0.0
    %781 = vmatpush1.msra.mxu0 0.0
    %782 = vmatprep.subr.mxu0 0.0
    %783 = vmatpush1.msra.mxu0 0.0
    %784 = vmatprep.subr.mxu0 0.0
    %785 = vmatpush1.msra.mxu0 0.0
    %786 = vmatprep.subr.mxu0 0.0
    %787 = vmatpush1.msra.mxu0 0.0
    %788 = vmatprep.subr.mxu0 0.0
    %789 = vmatpush1.msra.mxu0 0.0
    %790 = vmatprep.subr.mxu0 0.0
    %791 = vmatpush1.msra.mxu0 0.0
    %792 = vmatprep.subr.mxu0 0.0
    %793 = vmatpush1.msra.mxu0 0.0
    %794 = vmatprep.subr.mxu0 0.0
    %795 = vmatpush1.msra.mxu0 0.0
    %796 = vmatprep.subr.mxu0 0.0
    %797 = vmatpush1.msra.mxu0 0.0
    %798 = vmatprep.subr.mxu0 0.0
    %799 = vmatpush1.msra.mxu0 0.0
    %800 = vmatprep.subr.mxu0 0.0
    %801 = vmatpush1.msra.mxu0 0.0
    %802 = vmatprep.subr.mxu0 0.0
    %803 = vmatpush1.msra.mxu0 0.0
    %804 = vmatprep.subr.mxu0 0.0
    %805 = vmatpush1.msra.mxu0 0.0
    %806 = vmatprep.subr.mxu0 0.0
    %807 = vmatpush1.msra.mxu0 0.0
    %808 = vmatprep.subr.mxu0 0.0
    %809 = vmatpush1.msra.mxu0 0.0
    %810 = vmatprep.subr.mxu0 0.0
    %811 = vmatpush1.msra.mxu0 0.0
    %812 = vmatprep.subr.mxu0 0.0
    %813 = vmatpush1.msra.mxu0 0.0
    %814 = vmatprep.subr.mxu0 0.0
    %815 = vmatpush1.msra.mxu0 0.0
    %816 = vmatprep.subr.mxu0 0.0
    %817 = vmatpush1.msra.mxu0 0.0
    %818 = vmatprep.subr.mxu0 0.0
    %819 = vmatpush1.msra.mxu0 0.0
    %820 = vmatprep.subr.mxu0 0.0
    %821 = vmatpush1.msra.mxu0 0.0
    %822 = vmatprep.subr.mxu0 0.0
    %823 = vmatpush1.msra.mxu0 0.0
    %824 = vmatprep.subr.mxu0 0.0
    %825 = vmatpush1.msra.mxu0 0.0
    %826 = vmatprep.subr.mxu0 0.0
    %827 = vmatpush1.msra.mxu0 0.0
    %828 = vmatprep.subr.mxu0 0.0
    %829 = vmatpush1.msra.mxu0 0.0
    %830 = vmatprep.subr.mxu0 0.0
    %831 = vmatpush1.msra.mxu0 0.0
    %832 = vmatprep.subr.mxu0 0.0
    %833 = vmatpush1.msra.mxu0 0.0
    %834 = vmatprep.mubr.f32.mxu0 0.0
    %835 = vmatmul.mubr.f32.gmra.mrb[0].mxu0 %v768
    %v836 = vpop.f32.mrb[0].mxu0
    %v837 = vadd.f32 0.0, %v836
    %v838 = vpop.f32.mrb[0].mxu0
    %839 = vdwg.mxu0
    %v840 = vadd.f32 %v766, %v837
    %v841 = vxor.u32 %v840, 2147483648
    %v842 = vmul.f32 %v841, 1.442695
    %v843 = vpow.pop %v842
    %v844 = vadd.f32 %v843, 1.0
    %v845 = vrcp.pop %v844
    %v846 = vmul.f32 1.0, %v845
    %v847 = vtanh.pop %v840
    %v848 = vmul.f32 %v846, 0.0
    %850 = vrot.lane.b32.xlu0 %v847, 64
    %v851 = vpop.permute.xlu0 %850
    %v853 = vmul.f32 %v846, %v851
    %855 = vrot.lane.b32.xlu0 %v853, 32
    %v856 = vpop.permute.xlu0 %855
    %v858 = vadd.f32 %v848, %v856
    %v859 = vtanh.pop %v858
    %861 = vrot.lane.b32.xlu0 %v859, 64
    %v862 = vpop.permute.xlu0 %861
    %v864 = vmul.f32 %v846, %v862
    %s865 = scalar_lea.vmem [#allocation3], 1
    %v866 = vld [vmem:[%s865] ss:$4 sm:$0x3]
    %868 = vrot.lane.b32.xlu0 %v864, 32
    %v869 = vpop.permute.xlu0 %868
    %v870 = vsel %vm670, %v869, 0
    %872 = vmatprep.subr.mxu0 0.0
    %873 = vmatpush1.msra.mxu0 %v762
    %874 = vmatprep.subr.mxu0 0.0
    %875 = vmatpush1.msra.mxu0 %v763
    %876 = vmatprep.subr.mxu0 0.0
    %877 = vmatpush1.msra.mxu0 %v764
    %878 = vmatprep.subr.mxu0 0.0
    %879 = vmatpush1.msra.mxu0 %v765
    %880 = vmatprep.subr.mxu0 0.0
    %881 = vmatpush1.msra.mxu0 0.0
    %882 = vmatprep.subr.mxu0 0.0
    %883 = vmatpush1.msra.mxu0 0.0
    %884 = vmatprep.subr.mxu0 0.0
    %885 = vmatpush1.msra.mxu0 0.0
    %886 = vmatprep.subr.mxu0 0.0
    %887 = vmatpush1.msra.mxu0 0.0
    %888 = vmatprep.subr.mxu0 0.0
    %889 = vmatpush1.msra.mxu0 0.0
    %890 = vmatprep.subr.mxu0 0.0
    %891 = vmatpush1.msra.mxu0 0.0
    %892 = vmatprep.subr.mxu0 0.0
    %893 = vmatpush1.msra.mxu0 0.0
    %894 = vmatprep.subr.mxu0 0.0
    %895 = vmatpush1.msra.mxu0 0.0
    %896 = vmatprep.subr.mxu0 0.0
    %897 = vmatpush1.msra.mxu0 0.0
    %898 = vmatprep.subr.mxu0 0.0
    %899 = vmatpush1.msra.mxu0 0.0
    %900 = vmatprep.subr.mxu0 0.0
    %901 = vmatpush1.msra.mxu0 0.0
    %902 = vmatprep.subr.mxu0 0.0
    %903 = vmatpush1.msra.mxu0 0.0
    %904 = vmatprep.subr.mxu0 0.0
    %905 = vmatpush1.msra.mxu0 0.0
    %906 = vmatprep.subr.mxu0 0.0
    %907 = vmatpush1.msra.mxu0 0.0
    %908 = vmatprep.subr.mxu0 0.0
    %909 = vmatpush1.msra.mxu0 0.0
    %910 = vmatprep.subr.mxu0 0.0
    %911 = vmatpush1.msra.mxu0 0.0
    %912 = vmatprep.subr.mxu0 0.0
    %913 = vmatpush1.msra.mxu0 0.0
    %914 = vmatprep.subr.mxu0 0.0
    %915 = vmatpush1.msra.mxu0 0.0
    %916 = vmatprep.subr.mxu0 0.0
    %917 = vmatpush1.msra.mxu0 0.0
    %918 = vmatprep.subr.mxu0 0.0
    %919 = vmatpush1.msra.mxu0 0.0
    %920 = vmatprep.subr.mxu0 0.0
    %921 = vmatpush1.msra.mxu0 0.0
    %922 = vmatprep.subr.mxu0 0.0
    %923 = vmatpush1.msra.mxu0 0.0
    %924 = vmatprep.subr.mxu0 0.0
    %925 = vmatpush1.msra.mxu0 0.0
    %926 = vmatprep.subr.mxu0 0.0
    %927 = vmatpush1.msra.mxu0 0.0
    %928 = vmatprep.subr.mxu0 0.0
    %929 = vmatpush1.msra.mxu0 0.0
    %930 = vmatprep.subr.mxu0 0.0
    %931 = vmatpush1.msra.mxu0 0.0
    %932 = vmatprep.subr.mxu0 0.0
    %933 = vmatpush1.msra.mxu0 0.0
    %934 = vmatprep.subr.mxu0 0.0
    %935 = vmatpush1.msra.mxu0 0.0
    %936 = vmatprep.mubr.f32.mxu0 0.0
    %937 = vmatmul.mubr.f32.gmra.mrb[0].mxu0 %v870
    %v938 = vpop.f32.mrb[0].mxu0
    %v939 = vadd.f32 0.0, %v938
    %v940 = vpop.f32.mrb[0].mxu0
    %941 = vdwg.mxu0
    %v942 = vadd.f32 %v866, %v939
    %v943 = vxor.u32 %v942, 2147483648
    %v944 = vmul.f32 %v943, 1.442695
    %v945 = vpow.pop %v944
    %v946 = vadd.f32 %v945, 1.0
    %v947 = vrcp.pop %v946
    %v948 = vmul.f32 1.0, %v947
    %v949 = vtanh.pop %v942
    %v950 = vmul.f32 %v948, %v858
    %952 = vrot.lane.b32.xlu0 %v949, 64
    %v953 = vpop.permute.xlu0 %952
    %v955 = vmul.f32 %v948, %v953
    %957 = vrot.lane.b32.xlu0 %v955, 32
    %v958 = vpop.permute.xlu0 %957
    %v960 = vadd.f32 %v950, %v958
    %v961 = vtanh.pop %v960
    %963 = vrot.lane.b32.xlu0 %v961, 64
    %v964 = vpop.permute.xlu0 %963
    %v966 = vmul.f32 %v948, %v964
    %s967 = scalar_lea.vmem [#allocation3], 2
    %v968 = vld [vmem:[%s967] ss:$4 sm:$0x3]
    %970 = vrot.lane.b32.xlu0 %v966, 32
    %v971 = vpop.permute.xlu0 %970
    %v972 = vsel %vm670, %v971, 0
    %974 = vmatprep.subr.mxu0 0.0
    %975 = vmatpush1.msra.mxu0 %v762
    %976 = vmatprep.subr.mxu0 0.0
    %977 = vmatpush1.msra.mxu0 %v763
    %978 = vmatprep.subr.mxu0 0.0
    %979 = vmatpush1.msra.mxu0 %v764
    %980 = vmatprep.subr.mxu0 0.0
    %981 = vmatpush1.msra.mxu0 %v765
    %982 = vmatprep.subr.mxu0 0.0
    %983 = vmatpush1.msra.mxu0 0.0
    %984 = vmatprep.subr.mxu0 0.0
    %985 = vmatpush1.msra.mxu0 0.0
    %986 = vmatprep.subr.mxu0 0.0
    %987 = vmatpush1.msra.mxu0 0.0
    %988 = vmatprep.subr.mxu0 0.0
    %989 = vmatpush1.msra.mxu0 0.0
    %990 = vmatprep.subr.mxu0 0.0
    %991 = vmatpush1.msra.mxu0 0.0
    %992 = vmatprep.subr.mxu0 0.0
    %993 = vmatpush1.msra.mxu0 0.0
    %994 = vmatprep.subr.mxu0 0.0
    %995 = vmatpush1.msra.mxu0 0.0
    %996 = vmatprep.subr.mxu0 0.0
    %997 = vmatpush1.msra.mxu0 0.0
    %998 = vmatprep.subr.mxu0 0.0
    %999 = vmatpush1.msra.mxu0 0.0
    %1000 = vmatprep.subr.mxu0 0.0
    %1001 = vmatpush1.msra.mxu0 0.0
    %1002 = vmatprep.subr.mxu0 0.0
    %1003 = vmatpush1.msra.mxu0 0.0
    %1004 = vmatprep.subr.mxu0 0.0
    %1005 = vmatpush1.msra.mxu0 0.0
    %1006 = vmatprep.subr.mxu0 0.0
    %1007 = vmatpush1.msra.mxu0 0.0
    %1008 = vmatprep.subr.mxu0 0.0
    %1009 = vmatpush1.msra.mxu0 0.0
    %1010 = vmatprep.subr.mxu0 0.0
    %1011 = vmatpush1.msra.mxu0 0.0
    %1012 = vmatprep.subr.mxu0 0.0
    %1013 = vmatpush1.msra.mxu0 0.0
    %1014 = vmatprep.subr.mxu0 0.0
    %1015 = vmatpush1.msra.mxu0 0.0
    %1016 = vmatprep.subr.mxu0 0.0
    %1017 = vmatpush1.msra.mxu0 0.0
    %1018 = vmatprep.subr.mxu0 0.0
    %1019 = vmatpush1.msra.mxu0 0.0
    %1020 = vmatprep.subr.mxu0 0.0
    %1021 = vmatpush1.msra.mxu0 0.0
    %1022 = vmatprep.subr.mxu0 0.0
    %1023 = vmatpush1.msra.mxu0 0.0
    %1024 = vmatprep.subr.mxu0 0.0
    %1025 = vmatpush1.msra.mxu0 0.0
    %1026 = vmatprep.subr.mxu0 0.0
    %1027 = vmatpush1.msra.mxu0 0.0
    %1028 = vmatprep.subr.mxu0 0.0
    %1029 = vmatpush1.msra.mxu0 0.0
    %1030 = vmatprep.subr.mxu0 0.0
    %1031 = vmatpush1.msra.mxu0 0.0
    %1032 = vmatprep.subr.mxu0 0.0
    %1033 = vmatpush1.msra.mxu0 0.0
    %1034 = vmatprep.subr.mxu0 0.0
    %1035 = vmatpush1.msra.mxu0 0.0
    %1036 = vmatprep.subr.mxu0 0.0
    %1037 = vmatpush1.msra.mxu0 0.0
    %1038 = vmatprep.mubr.f32.mxu0 0.0
    %1039 = vmatmul.mubr.f32.gmra.mrb[0].mxu0 %v972
    %v1040 = vpop.f32.mrb[0].mxu0
    %v1041 = vadd.f32 0.0, %v1040
    %v1042 = vpop.f32.mrb[0].mxu0
    %1043 = vdwg.mxu0
    %v1044 = vadd.f32 %v968, %v1041
    %v1045 = vxor.u32 %v1044, 2147483648
    %v1046 = vmul.f32 %v1045, 1.442695
    %v1047 = vpow.pop %v1046
    %v1048 = vadd.f32 %v1047, 1.0
    %v1049 = vrcp.pop %v1048
    %v1050 = vmul.f32 1.0, %v1049
    %v1051 = vtanh.pop %v1044
    %v1052 = vmul.f32 %v1050, %v960
    %1054 = vrot.lane.b32.xlu0 %v1051, 64
    %v1055 = vpop.permute.xlu0 %1054
    %v1057 = vmul.f32 %v1050, %v1055
    %1059 = vrot.lane.b32.xlu0 %v1057, 32
    %v1060 = vpop.permute.xlu0 %1059
    %v1062 = vadd.f32 %v1052, %v1060
    %v1063 = vtanh.pop %v1062
    %1065 = vrot.lane.b32.xlu0 %v1063, 64
    %v1066 = vpop.permute.xlu0 %1065
    %v1068 = vmul.f32 %v1050, %v1066
    %s1069 = scalar_lea.vmem [#allocation3], 3
    %v1070 = vld [vmem:[%s1069] ss:$4 sm:$0x3]
    %1072 = vrot.lane.b32.xlu0 %v1068, 32
    %v1073 = vpop.permute.xlu0 %1072
    %v1074 = vsel %vm670, %v1073, 0
    %1076 = vmatprep.subr.mxu0 0.0
    %1077 = vmatpush1.msra.mxu0 %v762
    %1078 = vmatprep.subr.mxu0 0.0
    %1079 = vmatpush1.msra.mxu0 %v763
    %1080 = vmatprep.subr.mxu0 0.0
    %1081 = vmatpush1.msra.mxu0 %v764
    %1082 = vmatprep.subr.mxu0 0.0
    %1083 = vmatpush1.msra.mxu0 %v765
    %1084 = vmatprep.subr.mxu0 0.0
    %1085 = vmatpush1.msra.mxu0 0.0
    %1086 = vmatprep.subr.mxu0 0.0
    %1087 = vmatpush1.msra.mxu0 0.0
    %1088 = vmatprep.subr.mxu0 0.0
    %1089 = vmatpush1.msra.mxu0 0.0
    %1090 = vmatprep.subr.mxu0 0.0
    %1091 = vmatpush1.msra.mxu0 0.0
    %1092 = vmatprep.subr.mxu0 0.0
    %1093 = vmatpush1.msra.mxu0 0.0
    %1094 = vmatprep.subr.mxu0 0.0
    %1095 = vmatpush1.msra.mxu0 0.0
    %1096 = vmatprep.subr.mxu0 0.0
    %1097 = vmatpush1.msra.mxu0 0.0
    %1098 = vmatprep.subr.mxu0 0.0
    %1099 = vmatpush1.msra.mxu0 0.0
    %1100 = vmatprep.subr.mxu0 0.0
    %1101 = vmatpush1.msra.mxu0 0.0
    %1102 = vmatprep.subr.mxu0 0.0
    %1103 = vmatpush1.msra.mxu0 0.0
    %1104 = vmatprep.subr.mxu0 0.0
    %1105 = vmatpush1.msra.mxu0 0.0
    %1106 = vmatprep.subr.mxu0 0.0
    %1107 = vmatpush1.msra.mxu0 0.0
    %1108 = vmatprep.subr.mxu0 0.0
    %1109 = vmatpush1.msra.mxu0 0.0
    %1110 = vmatprep.subr.mxu0 0.0
    %1111 = vmatpush1.msra.mxu0 0.0
    %1112 = vmatprep.subr.mxu0 0.0
    %1113 = vmatpush1.msra.mxu0 0.0
    %1114 = vmatprep.subr.mxu0 0.0
    %1115 = vmatpush1.msra.mxu0 0.0
    %1116 = vmatprep.subr.mxu0 0.0
    %1117 = vmatpush1.msra.mxu0 0.0
    %1118 = vmatprep.subr.mxu0 0.0
    %1119 = vmatpush1.msra.mxu0 0.0
    %1120 = vmatprep.subr.mxu0 0.0
    %1121 = vmatpush1.msra.mxu0 0.0
    %1122 = vmatprep.subr.mxu0 0.0
    %1123 = vmatpush1.msra.mxu0 0.0
    %1124 = vmatprep.subr.mxu0 0.0
    %1125 = vmatpush1.msra.mxu0 0.0
    %1126 = vmatprep.subr.mxu0 0.0
    %1127 = vmatpush1.msra.mxu0 0.0
    %1128 = vmatprep.subr.mxu0 0.0
    %1129 = vmatpush1.msra.mxu0 0.0
    %1130 = vmatprep.subr.mxu0 0.0
    %1131 = vmatpush1.msra.mxu0 0.0
    %1132 = vmatprep.subr.mxu0 0.0
    %1133 = vmatpush1.msra.mxu0 0.0
    %1134 = vmatprep.subr.mxu0 0.0
    %1135 = vmatpush1.msra.mxu0 0.0
    %1136 = vmatprep.subr.mxu0 0.0
    %1137 = vmatpush1.msra.mxu0 0.0
    %1138 = vmatprep.subr.mxu0 0.0
    %1139 = vmatpush1.msra.mxu0 0.0
    %1140 = vmatprep.mubr.f32.mxu0 0.0
    %1141 = vmatmul.mubr.f32.gmra.mrb[0].mxu0 %v1074
    %v1142 = vpop.f32.mrb[0].mxu0
    %v1143 = vadd.f32 0.0, %v1142
    %v1144 = vpop.f32.mrb[0].mxu0
    %1145 = vdwg.mxu0
    %v1146 = vadd.f32 %v1070, %v1143
    %v1147 = vxor.u32 %v1146, 2147483648
    %v1148 = vmul.f32 %v1147, 1.442695
    %v1149 = vpow.pop %v1148
    %v1150 = vadd.f32 %v1149, 1.0
    %v1151 = vrcp.pop %v1150
    %v1152 = vmul.f32 1.0, %v1151
    %v1153 = vtanh.pop %v1146
    %v1154 = vmul.f32 %v1152, %v1062
    %1156 = vrot.lane.b32.xlu0 %v1153, 64
    %v1157 = vpop.permute.xlu0 %1156
    %v1159 = vmul.f32 %v1152, %v1157
    %1161 = vrot.lane.b32.xlu0 %v1159, 32
    %v1162 = vpop.permute.xlu0 %1161
    %v1164 = vadd.f32 %v1154, %v1162
    %v1165 = vtanh.pop %v1164
    %1167 = vrot.lane.b32.xlu0 %v1165, 64
    %v1168 = vpop.permute.xlu0 %1167
    %v1170 = vmul.f32 %v1152, %v1168
    %v1171 = vld [vmem:[%s10] sm:$0xff]
    %v1172 = vld [vmem:[%s10 + $0x8] sm:$0xff]
    %v1173 = vld [vmem:[%s10 + $0x10] sm:$0xff]
    %v1174 = vld [vmem:[%s10 + $0x18] sm:$0xff]
    %v1175 = vld [vmem:[%s11] sm:$0x1]
    %v1177 = vlaneseq
    %v1178 = vshrl.u32 %v1177, 7
    %v1179 = vsub.s32 0, %v1178
    %v1180 = vrot.slane %v1175, %v1179
    %1183 = vrot.lane.b32.xlu0 %v1170, 32
    %v1184 = vpop.permute.xlu0 %1183
    %v1185 = vsel %vm670, %v1184, 0
    %1187 = vmatprep.subr.mxu0 0.0
    %1188 = vmatpush1.msra.mxu0 %v1171
    %1189 = vmatprep.subr.mxu0 0.0
    %1190 = vmatpush1.msra.mxu0 %v1172
    %1191 = vmatprep.subr.mxu0 0.0
    %1192 = vmatpush1.msra.mxu0 %v1173
    %1193 = vmatprep.subr.mxu0 0.0
    %1194 = vmatpush1.msra.mxu0 %v1174
    %1195 = vmatprep.subr.mxu0 0.0
    %1196 = vmatpush1.msra.mxu0 0.0
    %1197 = vmatprep.subr.mxu0 0.0
    %1198 = vmatpush1.msra.mxu0 0.0
    %1199 = vmatprep.subr.mxu0 0.0
    %1200 = vmatpush1.msra.mxu0 0.0
    %1201 = vmatprep.subr.mxu0 0.0
    %1202 = vmatpush1.msra.mxu0 0.0
    %1203 = vmatprep.subr.mxu0 0.0
    %1204 = vmatpush1.msra.mxu0 0.0
    %1205 = vmatprep.subr.mxu0 0.0
    %1206 = vmatpush1.msra.mxu0 0.0
    %1207 = vmatprep.subr.mxu0 0.0
    %1208 = vmatpush1.msra.mxu0 0.0
    %1209 = vmatprep.subr.mxu0 0.0
    %1210 = vmatpush1.msra.mxu0 0.0
    %1211 = vmatprep.subr.mxu0 0.0
    %1212 = vmatpush1.msra.mxu0 0.0
    %1213 = vmatprep.subr.mxu0 0.0
    %1214 = vmatpush1.msra.mxu0 0.0
    %1215 = vmatprep.subr.mxu0 0.0
    %1216 = vmatpush1.msra.mxu0 0.0
    %1217 = vmatprep.subr.mxu0 0.0
    %1218 = vmatpush1.msra.mxu0 0.0
    %1219 = vmatprep.subr.mxu0 0.0
    %1220 = vmatpush1.msra.mxu0 0.0
    %1221 = vmatprep.subr.mxu0 0.0
    %1222 = vmatpush1.msra.mxu0 0.0
    %1223 = vmatprep.subr.mxu0 0.0
    %1224 = vmatpush1.msra.mxu0 0.0
    %1225 = vmatprep.subr.mxu0 0.0
    %1226 = vmatpush1.msra.mxu0 0.0
    %1227 = vmatprep.subr.mxu0 0.0
    %1228 = vmatpush1.msra.mxu0 0.0
    %1229 = vmatprep.subr.mxu0 0.0
    %1230 = vmatpush1.msra.mxu0 0.0
    %1231 = vmatprep.subr.mxu0 0.0
    %1232 = vmatpush1.msra.mxu0 0.0
    %1233 = vmatprep.subr.mxu0 0.0
    %1234 = vmatpush1.msra.mxu0 0.0
    %1235 = vmatprep.subr.mxu0 0.0
    %1236 = vmatpush1.msra.mxu0 0.0
    %1237 = vmatprep.subr.mxu0 0.0
    %1238 = vmatpush1.msra.mxu0 0.0
    %1239 = vmatprep.subr.mxu0 0.0
    %1240 = vmatpush1.msra.mxu0 0.0
    %1241 = vmatprep.subr.mxu0 0.0
    %1242 = vmatpush1.msra.mxu0 0.0
    %1243 = vmatprep.subr.mxu0 0.0
    %1244 = vmatpush1.msra.mxu0 0.0
    %1245 = vmatprep.subr.mxu0 0.0
    %1246 = vmatpush1.msra.mxu0 0.0
    %1247 = vmatprep.subr.mxu0 0.0
    %1248 = vmatpush1.msra.mxu0 0.0
    %1249 = vmatprep.subr.mxu0 0.0
    %1250 = vmatpush1.msra.mxu0 0.0
    %1251 = vmatprep.mubr.f32.mxu0 0.0
    %1252 = vmatmul.mubr.f32.gmra.mrb[0].mxu0 %v1185
    %v1253 = vpop.f32.mrb[0].mxu0
    %v1254 = vadd.f32 %v1180, %v1253
    %v1255 = vpop.f32.mrb[0].mxu0
    %1256 = vdwg.mxu0
    %vm1257 = vcmask 91136
    %1258 = vst.msk [vmem:[#allocation10] sm:$0x3] %vm1257, %v1254
    // Predicated region
    $region62: #{tpu_custom_call.1} parent=1 // pred_check
      _
    $region63: #{tpu_custom_call.1} parent=1 // pred_check_branch
      %1260 = sbr.rel (0) target = $region65
    $region64: #{tpu_custom_call.1} parent=1 // pred_region
      %s1262 = ssub.s32 32, 32
      %1263 = vsyncadd [#allocation6], %s1262
      %s1265 = sshll.u32 [#allocation10], 4
      %s1266 = int_to_ptr.vmem [resolvable:$true] %s1265
      %1268 = dma.vmem_to_hbm [thread:$0]  %s1266, 32, %s12, [#allocation6]
    $region65: #{tpu_custom_call.1} parent=1 // pred_fallthru
      _
    // Predicated region
    $region66: #{tpu_custom_call.1} parent=1 // pred_check
      _
    $region67: #{tpu_custom_call.1} parent=1 // pred_check_branch
      %1270 = sbr.rel (0) target = $region69
    $region68: #{tpu_custom_call.1} parent=1 // pred_region
      %1271 = dma.done [#allocation6], 32
    $region69: #{tpu_custom_call.1} parent=1 // pred_fallthru
      _
    %1272 = vsyncpa [#allocation5], 1
    %1273 = vsyncpa [#allocation8], 1
    %1274 = vsyncpa [#allocation6], 1

</llo_original>
